<compile_context>
chip_gen: v6e
topology: v6e:2x2x1
jax: 0.10.0
libtpu: 0.0.40
codegen_flags: <defaults>
</compile_context>

<pallas_src>
import functools
import math

import jax
import jax.numpy as jnp
from jax.experimental import pallas as pl
from jax.experimental.pallas import tpu as pltpu


def _rotate_half(x):
    # used only by the pure-JAX reference
    d = x.shape[-1] // 2
    return jnp.concatenate([-x[..., d:], x[..., :d]], axis=-1)


# ---------------------------------------------------------------------------
# Kernel A: pre-attention LayerNorm + fused QKV projection + RoPE.
# grid = (B, S // row_tile).  Outputs q_rot (B,S,H), k_rot^T (B,H,S), v (B,S,H).
# ---------------------------------------------------------------------------
def _qkv_rope_kernel(h_ref, cos_ref, sin_ref, g_ref, b_ref, wqkv_ref,
                     q_ref, kT_ref, v_ref, *, num_heads, head_dim, eps):
    H = h_ref.shape[2]
    Dh, d2 = head_dim, head_dim // 2
    cdt = wqkv_ref.dtype                                      # MXU compute dtype

    # ---- LayerNorm (f32 statistics) ----
    x = h_ref[0].astype(jnp.float32)                          # (rows, H)
    mu = jnp.mean(x, axis=-1, keepdims=True)
    var = jnp.mean((x - mu) ** 2, axis=-1, keepdims=True)
    xn = (x - mu) * jax.lax.rsqrt(var + eps)
    xn = xn * g_ref[0].astype(jnp.float32) + b_ref[0].astype(jnp.float32)

    # ---- fused QKV projection, f32 accumulation ----
    qkv = jnp.dot(xn.astype(cdt), wqkv_ref[...],
                  preferred_element_type=jnp.float32)         # (rows, 3H)
    q = qkv[:, :H] * (1.0 / math.sqrt(Dh))    # softmax scale folded into q
    k = qkv[:, H:2 * H]
    v = qkv[:, 2 * H:]

    # ---- RoPE (half-split formulation, per-head static lane slices) ----
    cos = cos_ref[...].astype(jnp.float32)                    # (rows, Dh)
    sin = sin_ref[...].astype(jnp.float32)
    c1, c2 = cos[:, :d2], cos[:, d2:]
    s1, s2 = sin[:, :d2], sin[:, d2:]

    k_parts = []
    for h in range(num_heads):   # elementwise-only loop; heavy loops are grid axes
        lo = h * Dh
        qa, qb = q[:, lo:lo + d2], q[:, lo + d2:lo + Dh]
        ka, kb = k[:, lo:lo + d2], k[:, lo + d2:lo + Dh]
        # rot = x*cos + rotate_half(x)*sin, written on half planes (no relayout)
        q_ref[0, :, lo:lo + d2] = (qa * c1 - qb * s1).astype(cdt)
        q_ref[0, :, lo + d2:lo + Dh] = (qb * c2 + qa * s2).astype(cdt)
        k_parts.append(ka * c1 - kb * s1)
        k_parts.append(kb * c2 + ka * s2)

    k_rot = jnp.concatenate(k_parts, axis=-1)                 # (rows, H)
    kT_ref[0] = k_rot.T.astype(cdt)          # store K pre-transposed: (H, rows)
    v_ref[0] = v.astype(cdt)


# ---------------------------------------------------------------------------
# Kernel B: flash attention.  grid = (B, num_heads, n_q_tiles, n_kv_chunks),
# kv axis last ("arbitrary" reduction), per-(b,h,q-tile) accumulators in VMEM.
# ---------------------------------------------------------------------------
def _flash_attn_kernel(q_ref, kT_ref, v_ref, mask_ref, ctx_ref,
                       m_scr, l_scr, acc_scr):
    ki = pl.program_id(3)

    @pl.when(ki == 0)
    def _():
        m_scr[...] = jnp.full_like(m_scr, -1e30)
        l_scr[...] = jnp.zeros_like(l_scr)
        acc_scr[...] = jnp.zeros_like(acc_scr)

    # full-Dh contraction; K was stored pre-transposed -> no in-loop transpose
    s = jnp.dot(q_ref[0], kT_ref[0],
                preferred_element_type=jnp.float32)           # (tq, tkv)
    s = s + mask_ref[...].astype(jnp.float32)                 # streamed mask tile

    m_prev = m_scr[...]
    m_new = jnp.maximum(m_prev, jnp.max(s, axis=-1, keepdims=True))
    alpha = jnp.exp(m_prev - m_new)
    p = jnp.exp(s - m_new)
    l_scr[...] = alpha * l_scr[...] + jnp.sum(p, axis=-1, keepdims=True)
    acc_scr[...] = alpha * acc_scr[...] + jnp.dot(
        p.astype(v_ref.dtype), v_ref[0], preferred_element_type=jnp.float32)
    m_scr[...] = m_new

    @pl.when(ki == pl.num_programs(3) - 1)
    def _():
        ctx_ref[0] = (acc_scr[...] *
                      pl.reciprocal(l_scr[...], approx=True)).astype(ctx_ref.dtype)


# ---------------------------------------------------------------------------
# Kernel C: Wo projection + residual + LN2 + fused SwiGLU MLP + residual.
# grid = (B, n_q_tiles).
# ---------------------------------------------------------------------------
def _attn_out_mlp_kernel(h_ref, ctx_ref, g_ref, b_ref, wo_ref, wgu_ref, wd_ref,
                         o_ref, *, eps):
    I = wd_ref.shape[0]
    cdt = wo_ref.dtype

    residual = h_ref[0].astype(jnp.float32)                   # (tq, H)
    # single fused Wo matmul over the whole (tq, H) ctx slab (full-H contraction)
    attn = jnp.dot(ctx_ref[0], wo_ref[...],
                   preferred_element_type=jnp.float32)
    h1 = residual + attn

    mu = jnp.mean(h1, axis=-1, keepdims=True)
    var = jnp.mean((h1 - mu) ** 2, axis=-1, keepdims=True)
    h1n = (h1 - mu) * jax.lax.rsqrt(var + eps)
    h1n = h1n * g_ref[0].astype(jnp.float32) + b_ref[0].astype(jnp.float32)

    gu = jnp.dot(h1n.astype(cdt), wgu_ref[...],
                 preferred_element_type=jnp.float32)          # (tq, 2I)
    gate, up = gu[:, :I], gu[:, I:]
    act = gate * jax.nn.sigmoid(gate) * up
    mlp = jnp.dot(act.astype(cdt), wd_ref[...],
                  preferred_element_type=jnp.float32)
    o_ref[0] = (h1 + mlp).astype(o_ref.dtype)


def _vmem_limit_bytes(blocks, headroom=8 << 20, floor=32 << 20, cap=60 << 20):
    """Scoped-VMEM target: 2x (double-buffered) resident blocks + headroom.

    Capped at 60 MiB so it stays under v7x's 64 MiB physical per-TC VMEM.
    """
    total = sum(math.prod(shape) * jnp.dtype(dtype).itemsize
                for shape, dtype in blocks)
    return int(min(cap, max(floor, 2 * total + headroom)))


def decoder_only_layer(hidden_states, attention_mask, cos, sin, params, *,
                       num_heads, head_dim, eps=1e-5, q_tile=None, kv_tile=None):
    B, S, H = hidden_states.shape
    Dh = head_dim
    assert num_heads * Dh == H, "H must equal num_heads * head_dim"
    assert Dh % 2 == 0, "head_dim must be even for RoPE"
    assert attention_mask.shape == (S, S), "additive mask is shared: (S, S)"
    I = params['w_gate'].shape[1]

    if q_tile is None:
        q_tile = S if S <= 256 else 256
    if kv_tile is None:
        kv_tile = S if S <= 512 else 512
    assert S % q_tile == 0 and S % kv_tile == 0
    row_tile = q_tile
    n_q, n_kv = S // q_tile, S // kv_tile

    # fused weight slabs (trace-time concat; would be done at weight-load time)
    wqkv = jnp.concatenate([params['wq'], params['wk'], params['wv']], axis=1)  # (H, 3H)
    wgu = jnp.concatenate([params['w_gate'], params['w_up']], axis=1)           # (H, 2I)
    wo, wd = params['wo'], params['w_down']
    cdt = wqkv.dtype          # MXU / intermediate compute dtype (bf16 capable)
    pdt = params['ln1_g'].dtype

    def const(shape):
        zeros = (0,) * len(shape)
        return pl.BlockSpec(shape, lambda *_: zeros)

    # ---------------- kernel A: LN1 + fused QKV + RoPE ----------------
    vmem_a = _vmem_limit_bytes([
        ((1, row_tile, H), hidden_states.dtype),
        ((row_tile, Dh), cos.dtype), ((row_tile, Dh), sin.dtype),
        ((1, H), pdt), ((1, H), pdt),
        ((H, 3 * H), cdt),
        ((1, row_tile, H), cdt), ((1, H, row_tile), cdt), ((1, row_tile, H), cdt),
    ])
    kernel_a = functools.partial(_qkv_rope_kernel,
                                 num_heads=num_heads, head_dim=Dh, eps=eps)
    q_rot, k_rot_t, v_proj = pl.pallas_call(
        kernel_a,
        out_shape=(
            jax.ShapeDtypeStruct((B, S, H), cdt),   # q (rotated, pre-scaled)
            jax.ShapeDtypeStruct((B, H, S), cdt),   # k (rotated, pre-transposed)
            jax.ShapeDtypeStruct((B, S, H), cdt),   # v
        ),
        grid_spec=pltpu.PrefetchScalarGridSpec(
            num_scalar_prefetch=0,
            grid=(B, S // row_tile),
            in_specs=[
                pl.BlockSpec((1, row_tile, H), lambda b, r: (b, r, 0)),
                pl.BlockSpec((row_tile, Dh), lambda b, r: (r, 0)),
                pl.BlockSpec((row_tile, Dh), lambda b, r: (r, 0)),
                const((1, H)), const((1, H)),
                const((H, 3 * H)),
            ],
            out_specs=[
                pl.BlockSpec((1, row_tile, H), lambda b, r: (b, r, 0)),
                pl.BlockSpec((1, H, row_tile), lambda b, r: (b, 0, r)),
                pl.BlockSpec((1, row_tile, H), lambda b, r: (b, r, 0)),
            ],
        ),
        compiler_params=pltpu.CompilerParams(
            dimension_semantics=("parallel", "parallel"),
            vmem_limit_bytes=vmem_a,
        ),
    )(hidden_states, cos, sin, params['ln1_g'], params['ln1_b'], wqkv)

    # ---------------- kernel B: flash attention ----------------
    vmem_b = _vmem_limit_bytes([
        ((1, q_tile, Dh), cdt), ((1, Dh, kv_tile), cdt), ((1, kv_tile, Dh), cdt),
        ((q_tile, kv_tile), attention_mask.dtype),
        ((1, q_tile, Dh), cdt),
        ((q_tile, 1), jnp.float32), ((q_tile, 1), jnp.float32),
        ((q_tile, Dh), jnp.float32),
    ])
    ctx = pl.pallas_call(
        _flash_attn_kernel,
        out_shape=jax.ShapeDtypeStruct((B, S, H), cdt),
        grid_spec=pltpu.PrefetchScalarGridSpec(
            num_scalar_prefetch=0,
            grid=(B, num_heads, n_q, n_kv),
            in_specs=[
                pl.BlockSpec((1, q_tile, Dh), lambda b, h, qi, ki: (b, qi, h)),
                pl.BlockSpec((1, Dh, kv_tile), lambda b, h, qi, ki: (b, h, ki)),
                pl.BlockSpec((1, kv_tile, Dh), lambda b, h, qi, ki: (b, ki, h)),
                pl.BlockSpec((q_tile, kv_tile), lambda b, h, qi, ki: (qi, ki)),
            ],
            out_specs=pl.BlockSpec((1, q_tile, Dh),
                                   lambda b, h, qi, ki: (b, qi, h)),
            scratch_shapes=[
                pltpu.VMEM((q_tile, 1), jnp.float32),    # running max
                pltpu.VMEM((q_tile, 1), jnp.float32),    # running denom
                pltpu.VMEM((q_tile, Dh), jnp.float32),   # running numerator
            ],
        ),
        compiler_params=pltpu.CompilerParams(
            dimension_semantics=("parallel", "parallel", "parallel", "arbitrary"),
            vmem_limit_bytes=vmem_b,
        ),
    )(q_rot, k_rot_t, v_proj, attention_mask)

    # ---------------- kernel C: Wo + residual + LN2 + MLP + residual ----------
    vmem_c = _vmem_limit_bytes([
        ((1, q_tile, H), hidden_states.dtype), ((1, q_tile, H), cdt),
        ((1, H), pdt), ((1, H), pdt),
        ((H, H), cdt), ((H, 2 * I), cdt), ((I, H), cdt),
        ((1, q_tile, H), hidden_states.dtype),
    ])
    kernel_c = functools.partial(_attn_out_mlp_kernel, eps=eps)
    out = pl.pallas_call(
        kernel_c,
        out_shape=jax.ShapeDtypeStruct((B, S, H), hidden_states.dtype),
        grid_spec=pltpu.PrefetchScalarGridSpec(
            num_scalar_prefetch=0,
            grid=(B, n_q),
            in_specs=[
                pl.BlockSpec((1, q_tile, H), lambda b, qi: (b, qi, 0)),
                pl.BlockSpec((1, q_tile, H), lambda b, qi: (b, qi, 0)),
                const((1, H)), const((1, H)),
                const((H, H)), const((H, 2 * I)), const((I, H)),
            ],
            out_specs=pl.BlockSpec((1, q_tile, H), lambda b, qi: (b, qi, 0)),
        ),
        compiler_params=pltpu.CompilerParams(
            dimension_semantics=("parallel", "parallel"),
            vmem_limit_bytes=vmem_c,
        ),
    )(hidden_states, ctx, params['ln2_g'], params['ln2_b'], wo, wgu, wd)

    return out


def _reference(hidden_states, attention_mask, cos, sin, params,
               *, num_heads, head_dim, eps=1e-5):
    """Pure-JAX f32 reference of the same forward."""
    B, S, H = hidden_states.shape

    def ln(x, g, b):
        mu = jnp.mean(x, -1, keepdims=True)
        var = jnp.mean((x - mu) ** 2, -1, keepdims=True)
        return (x - mu) * jax.lax.rsqrt(var + eps) * g[0] + b[0]

    x = hidden_states.astype(jnp.float32)
    res = x
    xn = ln(x, params['ln1_g'], params['ln1_b'])
    q = xn @ params['wq']
    k = xn @ params['wk']
    v = xn @ params['wv']
    q = q.reshape(B, S, num_heads, head_dim).transpose(0, 2, 1, 3)
    k = k.reshape(B, S, num_heads, head_dim).transpose(0, 2, 1, 3)
    v = v.reshape(B, S, num_heads, head_dim).transpose(0, 2, 1, 3)
    c = cos[None, None]
    s = sin[None, None]
    q = q * c + _rotate_half(q) * s
    k = k * c + _rotate_half(k) * s
    scores = jnp.einsum('bhqd,bhkd->bhqk', q, k) / math.sqrt(head_dim)
    scores = scores + attention_mask[None, None]
    p = jax.nn.softmax(scores, axis=-1)
    ctx = jnp.einsum('bhqk,bhkd->bhqd', p, v).transpose(0, 2, 1, 3).reshape(B, S, H)
    h1 = res + ctx @ params['wo']
    h1n = ln(h1, params['ln2_g'], params['ln2_b'])
    gate = h1n @ params['w_gate']
    up = h1n @ params['w_up']
    mlp = (gate * jax.nn.sigmoid(gate) * up) @ params['w_down']
    return h1 + mlp


if __name__ == "__main__":
    # Shapes are chosen so every BlockSpec dim is (8,128)-tileable: Dh = 128,
    # 128-wide q/kv tiles, 2 q-tiles x 2 kv-chunks x 2 heads x 2 batches.
    B, S, H = 2, 256, 256
    num_heads, head_dim = 2, 128
    I = 512  # MLP intermediate size

    key = jax.random.PRNGKey(0)
    keys = jax.random.split(key, 12)

    hidden_states = jax.random.normal(keys[0], (B, S, H), dtype=jnp.float32)

    # additive causal mask shared across the batch: 0 attendable, -1e9 otherwise
    causal = jnp.tril(jnp.ones((S, S), dtype=jnp.bool_))
    attention_mask = jnp.where(causal, 0.0, -1e9).astype(jnp.float32)

    # rotary embeddings (seq_positions = 0..S-1, prefill phase)
    pos = jnp.arange(S, dtype=jnp.float32)[:, None]
    inv_freq = 1.0 / (10000.0 ** (jnp.arange(0, head_dim, 2, dtype=jnp.float32) / head_dim))
    freqs = pos * inv_freq[None, :]                      # (S, Dh/2)
    emb = jnp.concatenate([freqs, freqs], axis=-1)       # (S, Dh)
    cos = jnp.cos(emb)
    sin = jnp.sin(emb)

    sc = 0.05
    params = {
        'ln1_g': jnp.ones((1, H), jnp.float32),
        'ln1_b': jnp.zeros((1, H), jnp.float32),
        'ln2_g': jnp.ones((1, H), jnp.float32),
        'ln2_b': jnp.zeros((1, H), jnp.float32),
        'wq': sc * jax.random.normal(keys[1], (H, H), jnp.float32),
        'wk': sc * jax.random.normal(keys[2], (H, H), jnp.float32),
        'wv': sc * jax.random.normal(keys[3], (H, H), jnp.float32),
        'wo': sc * jax.random.normal(keys[4], (H, H), jnp.float32),
        'w_gate': sc * jax.random.normal(keys[5], (H, I), jnp.float32),
        'w_up': sc * jax.random.normal(keys[6], (H, I), jnp.float32),
        'w_down': sc * jax.random.normal(keys[7], (I, H), jnp.float32),
    }

    ref = _reference(hidden_states, attention_mask, cos, sin, params,
                     num_heads=num_heads, head_dim=head_dim)

    # ---- f32 run: correctness check (approx reciprocal in softmax denom) ----
    out = decoder_only_layer(hidden_states, attention_mask, cos, sin, params,
                             num_heads=num_heads, head_dim=head_dim,
                             q_tile=128, kv_tile=128)
    out = jax.block_until_ready(out)
    assert out.shape == (B, S, H)
    err = jnp.max(jnp.abs(out - ref))
    assert jnp.allclose(out, ref, atol=1e-2, rtol=1e-2), f"f32 max err {err}"

    # ---- bf16 run: exercises the bf16-MXU compute path (loose check) ----
    params_bf16 = {k: (v.astype(jnp.bfloat16) if k.startswith('w') or k.startswith('ln')
                       else v) for k, v in params.items()}
    hs_bf16 = hidden_states.astype(jnp.bfloat16)
    out_bf16 = decoder_only_layer(hs_bf16, attention_mask, cos, sin, params_bf16,
                                  num_heads=num_heads, head_dim=head_dim,
                                  q_tile=128, kv_tile=128)
    out_bf16 = jax.block_until_ready(out_bf16)
    assert out_bf16.shape == (B, S, H)
    out_bf16_f32 = out_bf16.astype(jnp.float32)
    assert bool(jnp.all(jnp.isfinite(out_bf16_f32))), "bf16 output not finite"
    err_bf16 = jnp.max(jnp.abs(out_bf16_f32 - ref))
    assert err_bf16 < 0.25, f"bf16 max err {err_bf16}"

    print("KERNEL_OK")
</pallas_src>

<mosaic_0001>
module attributes {stable_mosaic.version = 11 : i64} {
  func.func @_qkv_rope_kernel(%arg0: i32, %arg1: i32, %arg2: memref<1x128x256xf32, #tpu.memory_space<vmem>>, %arg3: memref<128x128xf32, #tpu.memory_space<vmem>>, %arg4: memref<128x128xf32, #tpu.memory_space<vmem>>, %arg5: memref<1x256xf32, #tpu.memory_space<vmem>>, %arg6: memref<1x256xf32, #tpu.memory_space<vmem>>, %arg7: memref<256x768xf32, #tpu.memory_space<vmem>>, %arg8: memref<1x128x256xf32, #tpu.memory_space<vmem>>, %arg9: memref<1x256x128xf32, #tpu.memory_space<vmem>>, %arg10: memref<1x128x256xf32, #tpu.memory_space<vmem>>) attributes {dimension_semantics = [#tpu.dimension_semantics<parallel>, #tpu.dimension_semantics<parallel>], iteration_bounds = array<i64: 2, 2>, scalar_prefetch = 0 : i64, scratch_operands = 0 : i64, tpu.core_type = #tpu.core_type<tc>, window_params = [{transform_indices = @transform_0, window_bounds = array<i64: 1, 128, 256>}, {transform_indices = @transform_1, window_bounds = array<i64: 128, 128>}, {transform_indices = @transform_2, window_bounds = array<i64: 128, 128>}, {pipeline_mode = #tpu.pipeline_mode<synchronous>, transform_indices = @transform_3, window_bounds = array<i64: 1, 256>}, {pipeline_mode = #tpu.pipeline_mode<synchronous>, transform_indices = @transform_4, window_bounds = array<i64: 1, 256>}, {pipeline_mode = #tpu.pipeline_mode<synchronous>, transform_indices = @transform_5, window_bounds = array<i64: 256, 768>}, {transform_indices = @transform_6, window_bounds = array<i64: 1, 128, 256>}, {transform_indices = @transform_7, window_bounds = array<i64: 1, 256, 128>}, {transform_indices = @transform_8, window_bounds = array<i64: 1, 128, 256>}]} {
    %c0 = arith.constant 0 : index
    %c0_0 = arith.constant 0 : index
    %c0_1 = arith.constant 0 : index
    %0 = vector.load %arg2[%c0, %c0_0, %c0_1] : memref<1x128x256xf32, #tpu.memory_space<vmem>>, vector<1x128x256xf32>
    %1 = vector.shape_cast %0 : vector<1x128x256xf32> to vector<128x256xf32>
    %cst = arith.constant dense<0.000000e+00> : vector<128xf32>
    %2 = vector.multi_reduction <add>, %1, %cst [1] : vector<128x256xf32> to vector<128xf32>
    %3 = vector.shape_cast %2 : vector<128xf32> to vector<128x1xf32>
    %cst_2 = arith.constant 2.560000e+02 : f32
    %4 = vector.broadcast %cst_2 : f32 to vector<128x1xf32>
    %5 = arith.divf %3, %4 : vector<128x1xf32>
    %6 = vector.broadcast %5 : vector<128x1xf32> to vector<128x256xf32>
    %7 = arith.subf %1, %6 : vector<128x256xf32>
    %8 = arith.mulf %7, %7 : vector<128x256xf32>
    %cst_3 = arith.constant dense<0.000000e+00> : vector<128xf32>
    %9 = vector.multi_reduction <add>, %8, %cst_3 [1] : vector<128x256xf32> to vector<128xf32>
    %10 = vector.shape_cast %9 : vector<128xf32> to vector<128x1xf32>
    %cst_4 = arith.constant 2.560000e+02 : f32
    %11 = vector.broadcast %cst_4 : f32 to vector<128x1xf32>
    %12 = arith.divf %10, %11 : vector<128x1xf32>
    %13 = vector.broadcast %5 : vector<128x1xf32> to vector<128x256xf32>
    %14 = arith.subf %1, %13 : vector<128x256xf32>
    %cst_5 = arith.constant 9.99999974E-6 : f32
    %15 = vector.broadcast %cst_5 : f32 to vector<128x1xf32>
    %16 = arith.addf %12, %15 : vector<128x1xf32>
    %17 = math.rsqrt %16 : vector<128x1xf32>
    %18 = vector.broadcast %17 : vector<128x1xf32> to vector<128x256xf32>
    %19 = arith.mulf %14, %18 : vector<128x256xf32>
    %c0_6 = arith.constant 0 : index
    %c0_7 = arith.constant 0 : index
    %20 = vector.load %arg5[%c0_6, %c0_7] : memref<1x256xf32, #tpu.memory_space<vmem>>, vector<1x256xf32>
    %21 = vector.shape_cast %20 : vector<1x256xf32> to vector<256xf32>
    %22 = vector.shape_cast %21 : vector<256xf32> to vector<1x256xf32>
    %23 = vector.broadcast %22 : vector<1x256xf32> to vector<128x256xf32>
    %24 = arith.mulf %19, %23 : vector<128x256xf32>
    %c0_8 = arith.constant 0 : index
    %c0_9 = arith.constant 0 : index
    %25 = vector.load %arg6[%c0_8, %c0_9] : memref<1x256xf32, #tpu.memory_space<vmem>>, vector<1x256xf32>
    %26 = vector.shape_cast %25 : vector<1x256xf32> to vector<256xf32>
    %27 = vector.shape_cast %26 : vector<256xf32> to vector<1x256xf32>
    %28 = vector.broadcast %27 : vector<1x256xf32> to vector<128x256xf32>
    %29 = arith.addf %24, %28 : vector<128x256xf32>
    %c0_10 = arith.constant 0 : index
    %c0_11 = arith.constant 0 : index
    %30 = vector.load %arg7[%c0_10, %c0_11] : memref<256x768xf32, #tpu.memory_space<vmem>>, vector<256x768xf32>
    %cst_12 = arith.constant dense<0.000000e+00> : vector<128x768xf32>
    %31 = tpu.matmul %29, %30, %cst_12 {dimension_numbers = #tpu.dot_dimension_numbers<[1], [0], [0], [1], [0, 0, 1, 1], [], []>} : vector<128x256xf32>, vector<256x768xf32>, vector<128x768xf32> -> vector<128x768xf32>
    %32 = vector.extract_strided_slice %31 {offsets = [0, 0], sizes = [128, 256], strides = [1, 1]} : vector<128x768xf32> to vector<128x256xf32>
    %cst_13 = arith.constant 0.0883883461 : f32
    %33 = vector.broadcast %cst_13 : f32 to vector<128x256xf32>
    %34 = arith.mulf %32, %33 : vector<128x256xf32>
    %35 = vector.extract_strided_slice %31 {offsets = [0, 256], sizes = [128, 256], strides = [1, 1]} : vector<128x768xf32> to vector<128x256xf32>
    %36 = vector.extract_strided_slice %31 {offsets = [0, 512], sizes = [128, 256], strides = [1, 1]} : vector<128x768xf32> to vector<128x256xf32>
    %c0_14 = arith.constant 0 : index
    %c0_15 = arith.constant 0 : index
    %37 = vector.load %arg3[%c0_14, %c0_15] : memref<128x128xf32, #tpu.memory_space<vmem>>, vector<128x128xf32>
    %c0_16 = arith.constant 0 : index
    %c0_17 = arith.constant 0 : index
    %38 = vector.load %arg4[%c0_16, %c0_17] : memref<128x128xf32, #tpu.memory_space<vmem>>, vector<128x128xf32>
    %39 = vector.extract_strided_slice %37 {offsets = [0, 0], sizes = [128, 64], strides = [1, 1]} : vector<128x128xf32> to vector<128x64xf32>
    %40 = vector.extract_strided_slice %37 {offsets = [0, 64], sizes = [128, 64], strides = [1, 1]} : vector<128x128xf32> to vector<128x64xf32>
    %41 = vector.extract_strided_slice %38 {offsets = [0, 0], sizes = [128, 64], strides = [1, 1]} : vector<128x128xf32> to vector<128x64xf32>
    %42 = vector.extract_strided_slice %38 {offsets = [0, 64], sizes = [128, 64], strides = [1, 1]} : vector<128x128xf32> to vector<128x64xf32>
    %43 = vector.extract_strided_slice %34 {offsets = [0, 0], sizes = [128, 64], strides = [1, 1]} : vector<128x256xf32> to vector<128x64xf32>
    %44 = vector.extract_strided_slice %34 {offsets = [0, 64], sizes = [128, 64], strides = [1, 1]} : vector<128x256xf32> to vector<128x64xf32>
    %45 = vector.extract_strided_slice %35 {offsets = [0, 0], sizes = [128, 64], strides = [1, 1]} : vector<128x256xf32> to vector<128x64xf32>
    %46 = vector.extract_strided_slice %35 {offsets = [0, 64], sizes = [128, 64], strides = [1, 1]} : vector<128x256xf32> to vector<128x64xf32>
    %47 = arith.mulf %43, %39 : vector<128x64xf32>
    %48 = arith.mulf %44, %41 : vector<128x64xf32>
    %49 = arith.subf %47, %48 : vector<128x64xf32>
    %c0_18 = arith.constant 0 : index
    %c0_19 = arith.constant 0 : index
    %c0_20 = arith.constant 0 : index
    %50 = vector.load %arg8[%c0_18, %c0_19, %c0_20] : memref<1x128x256xf32, #tpu.memory_space<vmem>>, vector<1x128x64xf32>
    %51 = vector.shape_cast %50 : vector<1x128x64xf32> to vector<128x64xf32>
    %52 = vector.shape_cast %49 : vector<128x64xf32> to vector<1x128x64xf32>
    tpu.vector_store %arg8[%c0_18, %c0_19, %c0_20], %52 {strides = array<i32>} : memref<1x128x256xf32, #tpu.memory_space<vmem>>, vector<1x128x64xf32>,
    %53 = arith.mulf %44, %40 : vector<128x64xf32>
    %54 = arith.mulf %43, %42 : vector<128x64xf32>
    %55 = arith.addf %53, %54 : vector<128x64xf32>
    %c0_21 = arith.constant 0 : index
    %c0_22 = arith.constant 0 : index
    %c64 = arith.constant 64 : index
    %56 = vector.load %arg8[%c0_21, %c0_22, %c64] : memref<1x128x256xf32, #tpu.memory_space<vmem>>, vector<1x128x64xf32>
    %57 = vector.shape_cast %56 : vector<1x128x64xf32> to vector<128x64xf32>
    %58 = vector.shape_cast %55 : vector<128x64xf32> to vector<1x128x64xf32>
    tpu.vector_store %arg8[%c0_21, %c0_22, %c64], %58 {strides = array<i32>} : memref<1x128x256xf32, #tpu.memory_space<vmem>>, vector<1x128x64xf32>,
    %59 = arith.mulf %45, %39 : vector<128x64xf32>
    %60 = arith.mulf %46, %41 : vector<128x64xf32>
    %61 = arith.subf %59, %60 : vector<128x64xf32>
    %62 = arith.mulf %46, %40 : vector<128x64xf32>
    %63 = arith.mulf %45, %42 : vector<128x64xf32>
    %64 = arith.addf %62, %63 : vector<128x64xf32>
    %65 = vector.extract_strided_slice %34 {offsets = [0, 128], sizes = [128, 64], strides = [1, 1]} : vector<128x256xf32> to vector<128x64xf32>
    %66 = vector.extract_strided_slice %34 {offsets = [0, 192], sizes = [128, 64], strides = [1, 1]} : vector<128x256xf32> to vector<128x64xf32>
    %67 = vector.extract_strided_slice %35 {offsets = [0, 128], sizes = [128, 64], strides = [1, 1]} : vector<128x256xf32> to vector<128x64xf32>
    %68 = vector.extract_strided_slice %35 {offsets = [0, 192], sizes = [128, 64], strides = [1, 1]} : vector<128x256xf32> to vector<128x64xf32>
    %69 = arith.mulf %65, %39 : vector<128x64xf32>
    %70 = arith.mulf %66, %41 : vector<128x64xf32>
    %71 = arith.subf %69, %70 : vector<128x64xf32>
    %c0_23 = arith.constant 0 : index
    %c0_24 = arith.constant 0 : index
    %c128 = arith.constant 128 : index
    %72 = vector.load %arg8[%c0_23, %c0_24, %c128] : memref<1x128x256xf32, #tpu.memory_space<vmem>>, vector<1x128x64xf32>
    %73 = vector.shape_cast %72 : vector<1x128x64xf32> to vector<128x64xf32>
    %74 = vector.shape_cast %71 : vector<128x64xf32> to vector<1x128x64xf32>
    tpu.vector_store %arg8[%c0_23, %c0_24, %c128], %74 {strides = array<i32>} : memref<1x128x256xf32, #tpu.memory_space<vmem>>, vector<1x128x64xf32>,
    %75 = arith.mulf %66, %40 : vector<128x64xf32>
    %76 = arith.mulf %65, %42 : vector<128x64xf32>
    %77 = arith.addf %75, %76 : vector<128x64xf32>
    %c0_25 = arith.constant 0 : index
    %c0_26 = arith.constant 0 : index
    %c192 = arith.constant 192 : index
    %78 = vector.load %arg8[%c0_25, %c0_26, %c192] : memref<1x128x256xf32, #tpu.memory_space<vmem>>, vector<1x128x64xf32>
    %79 = vector.shape_cast %78 : vector<1x128x64xf32> to vector<128x64xf32>
    %80 = vector.shape_cast %77 : vector<128x64xf32> to vector<1x128x64xf32>
    tpu.vector_store %arg8[%c0_25, %c0_26, %c192], %80 {strides = array<i32>} : memref<1x128x256xf32, #tpu.memory_space<vmem>>, vector<1x128x64xf32>,
    %81 = arith.mulf %67, %39 : vector<128x64xf32>
    %82 = arith.mulf %68, %41 : vector<128x64xf32>
    %83 = arith.subf %81, %82 : vector<128x64xf32>
    %84 = arith.mulf %68, %40 : vector<128x64xf32>
    %85 = arith.mulf %67, %42 : vector<128x64xf32>
    %86 = arith.addf %84, %85 : vector<128x64xf32>
    %87 = tpu.concatenate %61, %64, %83, %86 in 1 : vector<128x64xf32>, vector<128x64xf32>, vector<128x64xf32>, vector<128x64xf32> -> vector<128x256xf32>
    %88 = tpu.transpose %87, [1, 0] : vector<128x256xf32> -> vector<256x128xf32>
    %c0_27 = arith.constant 0 : index
    %c0_28 = arith.constant 0 : index
    %c0_29 = arith.constant 0 : index
    %89 = vector.load %arg9[%c0_27, %c0_28, %c0_29] : memref<1x256x128xf32, #tpu.memory_space<vmem>>, vector<1x256x128xf32>
    %90 = vector.shape_cast %89 : vector<1x256x128xf32> to vector<256x128xf32>
    %91 = vector.shape_cast %88 : vector<256x128xf32> to vector<1x256x128xf32>
    tpu.vector_store %arg9[%c0_27, %c0_28, %c0_29], %91 {strides = array<i32>} : memref<1x256x128xf32, #tpu.memory_space<vmem>>, vector<1x256x128xf32>,
    %c0_30 = arith.constant 0 : index
    %c0_31 = arith.constant 0 : index
    %c0_32 = arith.constant 0 : index
    %92 = vector.load %arg10[%c0_30, %c0_31, %c0_32] : memref<1x128x256xf32, #tpu.memory_space<vmem>>, vector<1x128x256xf32>
    %93 = vector.shape_cast %92 : vector<1x128x256xf32> to vector<128x256xf32>
    %94 = vector.shape_cast %36 : vector<128x256xf32> to vector<1x128x256xf32>
    tpu.vector_store %arg10[%c0_30, %c0_31, %c0_32], %94 {strides = array<i32>} : memref<1x128x256xf32, #tpu.memory_space<vmem>>, vector<1x128x256xf32>,
    return
  }
  func.func @transform_0(%arg0: i32, %arg1: i32) -> (i32, i32, i32) {
    %c0_i32 = arith.constant 0 : i32
    %c0_i32_0 = arith.constant 0 : i32
    return %arg0, %arg1, %c0_i32 : i32, i32, i32
  }
  func.func @transform_1(%arg0: i32, %arg1: i32) -> (i32, i32) {
    %c0_i32 = arith.constant 0 : i32
    %c0_i32_0 = arith.constant 0 : i32
    return %arg1, %c0_i32 : i32, i32
  }
  func.func @transform_2(%arg0: i32, %arg1: i32) -> (i32, i32) {
    %c0_i32 = arith.constant 0 : i32
    %c0_i32_0 = arith.constant 0 : i32
    return %arg1, %c0_i32 : i32, i32
  }
  func.func @transform_3(%arg0: i32, %arg1: i32) -> (i32, i32) {
    %c0_i32 = arith.constant 0 : i32
    %c0_i32_0 = arith.constant 0 : i32
    %c0_i32_1 = arith.constant 0 : i32
    return %c0_i32, %c0_i32_0 : i32, i32
  }
  func.func @transform_4(%arg0: i32, %arg1: i32) -> (i32, i32) {
    %c0_i32 = arith.constant 0 : i32
    %c0_i32_0 = arith.constant 0 : i32
    %c0_i32_1 = arith.constant 0 : i32
    return %c0_i32, %c0_i32_0 : i32, i32
  }
  func.func @transform_5(%arg0: i32, %arg1: i32) -> (i32, i32) {
    %c0_i32 = arith.constant 0 : i32
    %c0_i32_0 = arith.constant 0 : i32
    %c0_i32_1 = arith.constant 0 : i32
    return %c0_i32, %c0_i32_0 : i32, i32
  }
  func.func @transform_6(%arg0: i32, %arg1: i32) -> (i32, i32, i32) {
    %c0_i32 = arith.constant 0 : i32
    %c0_i32_0 = arith.constant 0 : i32
    return %arg0, %arg1, %c0_i32 : i32, i32, i32
  }
  func.func @transform_7(%arg0: i32, %arg1: i32) -> (i32, i32, i32) {
    %c0_i32 = arith.constant 0 : i32
    %c0_i32_0 = arith.constant 0 : i32
    return %arg0, %c0_i32, %arg1 : i32, i32, i32
  }
  func.func @transform_8(%arg0: i32, %arg1: i32) -> (i32, i32, i32) {
    %c0_i32 = arith.constant 0 : i32
    %c0_i32_0 = arith.constant 0 : i32
    return %arg0, %arg1, %c0_i32 : i32, i32, i32
  }
}

</mosaic_0001>

<llo_original>
// kernel: tpu_custom_call.1
$region0: #{tpu_custom_call.1}
  #allocation0 [shape = 'u32[]', space=smem, size = 0x4, offset = 0x4, fixed_abs, tag = 'smem constant byte address 0x4 - core index']
  #allocation1 [shape = 'u32[144,128]{1,0:T(1,128)}', space=vmem, size = 0x12000, scoped, tag = 'internal scratch']
  %s0 = inlined_call_operand.hbm [shape: f32[2,256,256], index: 0, kind: input, shape index: {}]
  %s1 = inlined_call_operand.hbm [shape: f32[256,128], index: 1, kind: input, shape index: {}]
  %s2 = inlined_call_operand.hbm [shape: f32[256,128], index: 2, kind: input, shape index: {}]
  %s3 = inlined_call_operand.vmem [shape: f32[1,256], index: 3, kind: input, shape index: {}]
  %s4 = inlined_call_operand.vmem [shape: f32[1,256], index: 4, kind: input, shape index: {}]
  %s5 = inlined_call_operand.hbm [shape: f32[256,768], index: 5, kind: input, shape index: {}]
  %s6 = inlined_call_operand.hbm [shape: f32[2,256,256], index: 6, kind: output, shape index: {0}]
  %s7 = inlined_call_operand.hbm [shape: f32[2,256,256], index: 7, kind: output, shape index: {1}]
  %s8 = inlined_call_operand.hbm [shape: f32[2,256,256], index: 8, kind: output, shape index: {2}]
  %9 = xla_tuple %s6, %s7, %s8
  %s10 = sld [smem:[#allocation0]]
  $region89: #{tpu_custom_call.1} parent=0
    _
  %s12 = ssub.s32 1, %s10
  %s13 = scalar_select 0, %s12, %s10
  $region1: #{tpu_custom_call.1} parent=0
    #allocation2 [shape = 'u8[262144]{0}', space=vmem, size = 0x40000, scoped, tag = 'input window, operand 0']
    #allocation3 [shape = 's32[2]{0}', space=sflag, size = 0x8, scoped, tag = 'scoped memory for tpu_custom_call.1']
    #allocation4 [shape = 's32[2]{0}', space=sflag, size = 0x8, scoped, tag = 'scoped memory for tpu_custom_call.1']
    #allocation5 [shape = 'u8[131072]{0}', space=vmem, size = 0x20000, scoped, tag = 'input window, operand 1']
    #allocation6 [shape = 's32[2]{0}', space=sflag, size = 0x8, scoped, tag = 'scoped memory for tpu_custom_call.1']
    #allocation7 [shape = 'u8[131072]{0}', space=vmem, size = 0x20000, scoped, tag = 'input window, operand 2']
    #allocation8 [shape = 'u8[786432]{0}', space=vmem, size = 0xc0000, scoped, tag = 'input window, operand 5, single buffered']
    #allocation9 [shape = 's32[1]{0}', space=sflag, size = 0x4, scoped, tag = 'scoped memory for tpu_custom_call.1']
    #allocation10 [shape = 'u8[262144]{0}', space=vmem, size = 0x40000, scoped, tag = 'output window, operand 0']
    #allocation11 [shape = 'u8[262144]{0}', space=vmem, size = 0x40000, scoped, tag = 'output window, operand 1']
    #allocation12 [shape = 's32[2]{0}', space=sflag, size = 0x8, scoped, tag = 'scoped memory for tpu_custom_call.1']
    #allocation13 [shape = 'u8[262144]{0}', space=vmem, size = 0x40000, scoped, tag = 'output window, operand 2']
    %14 = vsyncpa [#allocation3], 0
    %s15 = scalar_lea.sflag [#allocation3], 1
    %16 = vsyncpa %s15, 0
    %17 = vsyncpa [#allocation6], 0
    %s18 = scalar_lea.sflag [#allocation6], 1
    %19 = vsyncpa %s18, 0
    %20 = vsyncpa [#allocation9], 0
    %21 = vsyncpa [#allocation4], 0
    %s22 = scalar_lea.sflag [#allocation4], 1
    %23 = vsyncpa %s22, 0
    %24 = vsyncpa [#allocation12], 0
    %s25 = scalar_lea.sflag [#allocation12], 1
    %26 = vsyncpa %s25, 0
    loop: start=0, step=1, limit=6
    $region2: #{tpu_custom_call.1} parent=1 // loop_pre_header
      _
    $region3: #{tpu_custom_call.1} parent=1 // loop_header
      %s28 = sphi 0, %s32
      %p29 = scmp.ge.s32.totalorder %s28, 6
      %s35 = sphi 0, %s47
      %s36 = sphi 0, %s43
      %s37 = sphi 0, %s35
      %s38 = sphi 0, %s36
      %s39 = sphi 0, %s37
      %s40 = sphi 0, %s38
      %s52 = sphi 0, %s54
      %s55 = sphi 0, %s52
      %s56 = sphi 0, %s55
      %s72 = sphi 0, %s56
      %s78 = sphi 0, %s80
      %s81 = sphi 0, %s78
      %s82 = sphi 0, %s81
      %s98 = sphi 0, %s82
      %s104 = sphi 0, %s106
      %s107 = sphi 0, %s104
      %s108 = sphi 0, %s107
      %s124 = sphi 0, %s108
      %s128 = sphi 0, %s128
      %s130 = sphi 0, %s128
      %s131 = sphi 0, %s130
      %s145 = sphi 0, %s131
      %s149 = sphi 0, %s149
      %s151 = sphi 0, %s149
      %s152 = sphi 0, %s151
      %s166 = sphi 0, %s152
      %s170 = sphi 0, %s170
      %s172 = sphi 0, %s170
      %s173 = sphi 0, %s172
      %s187 = sphi 0, %s173
      %s195 = sphi 0, %s197
      %s198 = sphi 0, %s195
      %s199 = sphi 0, %s198
      %s215 = sphi 0, %s199
      %s223 = sphi 0, %s225
      %s226 = sphi 0, %s223
      %s227 = sphi 0, %s226
      %s243 = sphi 0, %s227
      %s251 = sphi 0, %s253
      %s254 = sphi 0, %s251
      %s255 = sphi 0, %s254
      %s271 = sphi 0, %s255
    $region4: #{tpu_custom_call.1} parent=1 // loop_header_branch
      %31 = sbr.rel (%p29) target = $region8
    $region5: #{tpu_custom_call.1} parent=1 // loop_body
      %s33 = ssub.s32 %s28, 1
      %s34 = ssub.s32 %s28, 2
      %s41 = sadd.s32 1, %s36
      %p42 = scmp.ge.s32.totalorder %s41, 2
      %s43 = scalar_select %p42, 0, %s41
      %s44 = sadd.s32 1, %s35
      %s45 = scalar_select %p42, %s44, %s35
      %p46 = scmp.ge.s32.totalorder %s45, 2
      %s47 = scalar_select %p46, 0, %s45
      %s48 = ssub.s32 %s35, %s47
      %s49 = ssub.s32 %s36, %s43
      %s50 = sor.u32 %s48, %s49
      %p51 = scmp.eq.s32.totalorder %s50, 0
      %s53 = sadd.s32 %s52, 1
      %s54 = scalar_select %p51, %s52, %s53
      %p57 = pneg %p51
      %p58 = scmp.eq.s32.totalorder %s28, 3
      %p59 = por %p57, %p58
      %p60 = scmp.ne.s32.totalorder %s52, %s55
      %p61 = scmp.eq.s32.totalorder %s28, 0
      %p62 = por %p60, %p61
      %p63 = scmp.ne.s32.totalorder %s52, %s55
      %p64 = scmp.eq.s32.totalorder %s33, 3
      %p65 = por %p63, %p64
      %p66 = scmp.ne.s32.totalorder %s55, %s56
      %p67 = scmp.eq.s32.totalorder %s33, 0
      %p68 = por %p66, %p67
      %p69 = scmp.ne.s32.totalorder %s55, %s56
      %p70 = scmp.eq.s32.totalorder %s34, 3
      %p71 = por %p69, %p70
      %p73 = scmp.ne.s32.totalorder %s56, %s72
      %p74 = scmp.eq.s32.totalorder %s34, 0
      %p75 = por %p73, %p74
      %s76 = ssub.s32 %s36, %s43
      %p77 = scmp.eq.s32.totalorder %s76, 0
      %s79 = sadd.s32 %s78, 1
      %s80 = scalar_select %p77, %s78, %s79
      %p83 = pneg %p77
      %p84 = scmp.eq.s32.totalorder %s28, 3
      %p85 = por %p83, %p84
      %p86 = scmp.ne.s32.totalorder %s78, %s81
      %p87 = scmp.eq.s32.totalorder %s28, 0
      %p88 = por %p86, %p87
      %p89 = scmp.ne.s32.totalorder %s78, %s81
      %p90 = scmp.eq.s32.totalorder %s33, 3
      %p91 = por %p89, %p90
      %p92 = scmp.ne.s32.totalorder %s81, %s82
      %p93 = scmp.eq.s32.totalorder %s33, 0
      %p94 = por %p92, %p93
      %p95 = scmp.ne.s32.totalorder %s81, %s82
      %p96 = scmp.eq.s32.totalorder %s34, 3
      %p97 = por %p95, %p96
      %p99 = scmp.ne.s32.totalorder %s82, %s98
      %p100 = scmp.eq.s32.totalorder %s34, 0
      %p101 = por %p99, %p100
      %s102 = ssub.s32 %s36, %s43
      %p103 = scmp.eq.s32.totalorder %s102, 0
      %s105 = sadd.s32 %s104, 1
      %s106 = scalar_select %p103, %s104, %s105
      %p109 = pneg %p103
      %p110 = scmp.eq.s32.totalorder %s28, 3
      %p111 = por %p109, %p110
      %p112 = scmp.ne.s32.totalorder %s104, %s107
      %p113 = scmp.eq.s32.totalorder %s28, 0
      %p114 = por %p112, %p113
      %p115 = scmp.ne.s32.totalorder %s104, %s107
      %p116 = scmp.eq.s32.totalorder %s33, 3
      %p117 = por %p115, %p116
      %p118 = scmp.ne.s32.totalorder %s107, %s108
      %p119 = scmp.eq.s32.totalorder %s33, 0
      %p120 = por %p118, %p119
      %p121 = scmp.ne.s32.totalorder %s107, %s108
      %p122 = scmp.eq.s32.totalorder %s34, 3
      %p123 = por %p121, %p122
      %p125 = scmp.ne.s32.totalorder %s108, %s124
      %p126 = scmp.eq.s32.totalorder %s34, 0
      %p127 = por %p125, %p126
      %s129 = sadd.s32 %s128, 1
      %p132 = scmp.eq.s32.totalorder %s28, 3
      %p133 = scmp.ne.s32.totalorder %s128, %s130
      %p134 = scmp.eq.s32.totalorder %s28, 0
      %p135 = por %p133, %p134
      %p136 = scmp.ne.s32.totalorder %s128, %s130
      %p137 = scmp.eq.s32.totalorder %s33, 3
      %p138 = por %p136, %p137
      %p139 = scmp.ne.s32.totalorder %s130, %s131
      %p140 = scmp.eq.s32.totalorder %s33, 0
      %p141 = por %p139, %p140
      %p142 = scmp.ne.s32.totalorder %s130, %s131
      %p143 = scmp.eq.s32.totalorder %s34, 3
      %p144 = por %p142, %p143
      %p146 = scmp.ne.s32.totalorder %s131, %s145
      %p147 = scmp.eq.s32.totalorder %s34, 0
      %p148 = por %p146, %p147
      %s150 = sadd.s32 %s149, 1
      %p153 = scmp.eq.s32.totalorder %s28, 3
      %p154 = scmp.ne.s32.totalorder %s149, %s151
      %p155 = scmp.eq.s32.totalorder %s28, 0
      %p156 = por %p154, %p155
      %p157 = scmp.ne.s32.totalorder %s149, %s151
      %p158 = scmp.eq.s32.totalorder %s33, 3
      %p159 = por %p157, %p158
      %p160 = scmp.ne.s32.totalorder %s151, %s152
      %p161 = scmp.eq.s32.totalorder %s33, 0
      %p162 = por %p160, %p161
      %p163 = scmp.ne.s32.totalorder %s151, %s152
      %p164 = scmp.eq.s32.totalorder %s34, 3
      %p165 = por %p163, %p164
      %p167 = scmp.ne.s32.totalorder %s152, %s166
      %p168 = scmp.eq.s32.totalorder %s34, 0
      %p169 = por %p167, %p168
      %s171 = sadd.s32 %s170, 1
      %p174 = scmp.eq.s32.totalorder %s28, 3
      %p175 = scmp.ne.s32.totalorder %s170, %s172
      %p176 = scmp.eq.s32.totalorder %s28, 0
      %p177 = por %p175, %p176
      %p178 = scmp.ne.s32.totalorder %s170, %s172
      %p179 = scmp.eq.s32.totalorder %s33, 3
      %p180 = por %p178, %p179
      %p181 = scmp.ne.s32.totalorder %s172, %s173
      %p182 = scmp.eq.s32.totalorder %s33, 0
      %p183 = por %p181, %p182
      %p184 = scmp.ne.s32.totalorder %s172, %s173
      %p185 = scmp.eq.s32.totalorder %s34, 3
      %p186 = por %p184, %p185
      %p188 = scmp.ne.s32.totalorder %s173, %s187
      %p189 = scmp.eq.s32.totalorder %s34, 0
      %p190 = por %p188, %p189
      %s191 = ssub.s32 %s35, %s47
      %s192 = ssub.s32 %s36, %s43
      %s193 = sor.u32 %s191, %s192
      %p194 = scmp.eq.s32.totalorder %s193, 0
      %s196 = sadd.s32 %s195, 1
      %s197 = scalar_select %p194, %s195, %s196
      %p200 = pneg %p194
      %p201 = scmp.eq.s32.totalorder %s28, 3
      %p202 = por %p200, %p201
      %p203 = scmp.ne.s32.totalorder %s195, %s198
      %p204 = scmp.eq.s32.totalorder %s28, 0
      %p205 = por %p203, %p204
      %p206 = scmp.ne.s32.totalorder %s195, %s198
      %p207 = scmp.eq.s32.totalorder %s33, 3
      %p208 = por %p206, %p207
      %p209 = scmp.ne.s32.totalorder %s198, %s199
      %p210 = scmp.eq.s32.totalorder %s33, 0
      %p211 = por %p209, %p210
      %p212 = scmp.ne.s32.totalorder %s198, %s199
      %p213 = scmp.eq.s32.totalorder %s34, 3
      %p214 = por %p212, %p213
      %p216 = scmp.ne.s32.totalorder %s199, %s215
      %p217 = scmp.eq.s32.totalorder %s34, 0
      %p218 = por %p216, %p217
      %s219 = ssub.s32 %s35, %s47
      %s220 = ssub.s32 %s36, %s43
      %s221 = sor.u32 %s219, %s220
      %p222 = scmp.eq.s32.totalorder %s221, 0
      %s224 = sadd.s32 %s223, 1
      %s225 = scalar_select %p222, %s223, %s224
      %p228 = pneg %p222
      %p229 = scmp.eq.s32.totalorder %s28, 3
      %p230 = por %p228, %p229
      %p231 = scmp.ne.s32.totalorder %s223, %s226
      %p232 = scmp.eq.s32.totalorder %s28, 0
      %p233 = por %p231, %p232
      %p234 = scmp.ne.s32.totalorder %s223, %s226
      %p235 = scmp.eq.s32.totalorder %s33, 3
      %p236 = por %p234, %p235
      %p237 = scmp.ne.s32.totalorder %s226, %s227
      %p238 = scmp.eq.s32.totalorder %s33, 0
      %p239 = por %p237, %p238
      %p240 = scmp.ne.s32.totalorder %s226, %s227
      %p241 = scmp.eq.s32.totalorder %s34, 3
      %p242 = por %p240, %p241
      %p244 = scmp.ne.s32.totalorder %s227, %s243
      %p245 = scmp.eq.s32.totalorder %s34, 0
      %p246 = por %p244, %p245
      %s247 = ssub.s32 %s35, %s47
      %s248 = ssub.s32 %s36, %s43
      %s249 = sor.u32 %s247, %s248
      %p250 = scmp.eq.s32.totalorder %s249, 0
      %s252 = sadd.s32 %s251, 1
      %s253 = scalar_select %p250, %s251, %s252
      %p256 = pneg %p250
      %p257 = scmp.eq.s32.totalorder %s28, 3
      %p258 = por %p256, %p257
      %p259 = scmp.ne.s32.totalorder %s251, %s254
      %p260 = scmp.eq.s32.totalorder %s28, 0
      %p261 = por %p259, %p260
      %p262 = scmp.ne.s32.totalorder %s251, %s254
      %p263 = scmp.eq.s32.totalorder %s33, 3
      %p264 = por %p262, %p263
      %p265 = scmp.ne.s32.totalorder %s254, %s255
      %p266 = scmp.eq.s32.totalorder %s33, 0
      %p267 = por %p265, %p266
      %p268 = scmp.ne.s32.totalorder %s254, %s255
      %p269 = scmp.eq.s32.totalorder %s34, 3
      %p270 = por %p268, %p269
      %p272 = scmp.ne.s32.totalorder %s255, %s271
      %p273 = scmp.eq.s32.totalorder %s34, 0
      %p274 = por %p272, %p273
      %p275 = scmp.le.s32.totalorder 1, %s28
      %p276 = scmp.lt.s32.totalorder %s28, 5
      %p277 = pnand %p275, %p276
      %p278 = pneg %p277
      // Predicated region
      $region9: #{tpu_custom_call.1} parent=5 // pred_check
        _
      $region10: #{tpu_custom_call.1} parent=5 // pred_check_branch
        %280 = sbr.rel (%p277) target = $region12
      $region11: #{tpu_custom_call.1} parent=5 // pred_region
        %s281 = ssub.s32 %s28, 1
        // Predicated region
        $region13: #{tpu_custom_call.1} parent=11 // pred_check
          %p282 = pneg %p141
        $region14: #{tpu_custom_call.1} parent=11 // pred_check_branch
          %284 = sbr.rel (%p282) target = $region16
        $region15: #{tpu_custom_call.1} parent=11 // pred_region
          _
        $region16: #{tpu_custom_call.1} parent=11 // pred_fallthru
          _
        // Predicated region
        $region17: #{tpu_custom_call.1} parent=11 // pred_check
          %p285 = pneg %p162
        $region18: #{tpu_custom_call.1} parent=11 // pred_check_branch
          %287 = sbr.rel (%p285) target = $region20
        $region19: #{tpu_custom_call.1} parent=11 // pred_region
          _
        $region20: #{tpu_custom_call.1} parent=11 // pred_fallthru
          _
        // Predicated region
        $region21: #{tpu_custom_call.1} parent=11 // pred_check
          %p288 = pneg %p183
        $region22: #{tpu_custom_call.1} parent=11 // pred_check_branch
          %290 = sbr.rel (%p288) target = $region24
        $region23: #{tpu_custom_call.1} parent=11 // pred_region
          %s292 = ssub.s32 24576, 24576
          %293 = vsyncadd [#allocation9], %s292
          %s294 = sshll.u32 [#allocation8], 4
          %s295 = int_to_ptr.vmem [resolvable:$true] %s294
          %300 = dma.hbm_to_vmem [thread:$0]  %s5, 24576, %s295, [#allocation9], 768, 768, 48
        $region24: #{tpu_custom_call.1} parent=11 // pred_fallthru
          _
      $region12: #{tpu_custom_call.1} parent=5 // pred_fallthru
        _
      %p301 = scmp.lt.s32.totalorder %s28, 4
      // Predicated region
      $region25: #{tpu_custom_call.1} parent=5 // pred_check
        %p302 = pneg %p301
      $region26: #{tpu_custom_call.1} parent=5 // pred_check_branch
        %304 = sbr.rel (%p302) target = $region28
      $region27: #{tpu_custom_call.1} parent=5 // pred_region
        // Predicated region
        $region29: #{tpu_custom_call.1} parent=27 // pred_check
          %p305 = pneg %p62
        $region30: #{tpu_custom_call.1} parent=27 // pred_check_branch
          %307 = sbr.rel (%p305) target = $region32
        $region31: #{tpu_custom_call.1} parent=27 // pred_region
          %s308 = sand.u32 %s52, 1
          %s309 = scalar_lea.sflag [#allocation3], %s308
          %s310 = sand.u32 %s52, 1
          %s311 = smul.addr %s310, 256
          %s312 = scalar_lea.vmem [#allocation2], %s311
          %s313 = smul.u32 16, %s36
          %s315 = ssub.s32 4096, 4096
          %316 = vsyncadd %s309, %s315
          %s317 = smul.addr %s313, 2
          %s318 = smul.addr %s35, 64
          %s319 = sadd.s32 %s317, %s318
          %s320 = smul.addr %s319, 128
          %s321 = scalar_lea.hbm %s0, %s320
          %s322 = sshll.u32 %s312, 4
          %s323 = int_to_ptr.vmem [resolvable:$true] %s322
          %328 = dma.hbm_to_vmem [thread:$0]  %s321, 4096, %s323, %s309, 256, 256, 16
        $region32: #{tpu_custom_call.1} parent=27 // pred_fallthru
          _
        // Predicated region
        $region33: #{tpu_custom_call.1} parent=27 // pred_check
          %p329 = pneg %p88
        $region34: #{tpu_custom_call.1} parent=27 // pred_check_branch
          %331 = sbr.rel (%p329) target = $region36
        $region35: #{tpu_custom_call.1} parent=27 // pred_region
          %s332 = sand.u32 %s28, 1
          %s333 = scalar_lea.sflag [#allocation6], %s332
          %s334 = sand.u32 %s78, 1
          %s335 = smul.addr %s334, 128
          %s336 = scalar_lea.vmem [#allocation5], %s335
          %s337 = smul.u32 16, %s36
          %s339 = ssub.s32 2048, 2048
          %340 = vsyncadd %s333, %s339
          %s341 = smul.addr %s337, 128
          %s342 = scalar_lea.hbm %s1, %s341
          %s343 = sshll.u32 %s336, 4
          %s344 = int_to_ptr.vmem [resolvable:$true] %s343
          %349 = dma.hbm_to_vmem [thread:$0]  %s342, 2048, %s344, %s333, 128, 128, 8
        $region36: #{tpu_custom_call.1} parent=27 // pred_fallthru
          _
        // Predicated region
        $region37: #{tpu_custom_call.1} parent=27 // pred_check
          %p350 = pneg %p114
        $region38: #{tpu_custom_call.1} parent=27 // pred_check_branch
          %352 = sbr.rel (%p350) target = $region40
        $region39: #{tpu_custom_call.1} parent=27 // pred_region
          %s353 = sand.u32 %s28, 1
          %s354 = scalar_lea.sflag [#allocation6], %s353
          %s355 = sand.u32 %s104, 1
          %s356 = smul.addr %s355, 128
          %s357 = scalar_lea.vmem [#allocation7], %s356
          %s358 = smul.u32 16, %s36
          %s360 = ssub.s32 2048, 2048
          %361 = vsyncadd %s354, %s360
          %s362 = smul.addr %s358, 128
          %s363 = scalar_lea.hbm %s2, %s362
          %s364 = sshll.u32 %s357, 4
          %s365 = int_to_ptr.vmem [resolvable:$true] %s364
          %370 = dma.hbm_to_vmem [thread:$0]  %s363, 2048, %s365, %s354, 128, 128, 8
        $region40: #{tpu_custom_call.1} parent=27 // pred_fallthru
          _
      $region28: #{tpu_custom_call.1} parent=5 // pred_fallthru
        _
      %p371 = scmp.le.s32.totalorder 1, %s28
      %p372 = scmp.lt.s32.totalorder %s28, 5
      %p373 = pnand %p371, %p372
      %p374 = pneg %p373
      // Predicated region
      $region41: #{tpu_custom_call.1} parent=5 // pred_check
        _
      $region42: #{tpu_custom_call.1} parent=5 // pred_check_branch
        %376 = sbr.rel (%p373) target = $region44
      $region43: #{tpu_custom_call.1} parent=5 // pred_region
        %s377 = ssub.s32 %s28, 1
        %s378 = sand.u32 %s55, 1
        %s379 = scalar_lea.sflag [#allocation3], %s378
        %s380 = sand.u32 %s55, 1
        %s381 = smul.addr %s380, 256
        %s382 = scalar_lea.vmem [#allocation2], %s381
        // Predicated region
        $region45: #{tpu_custom_call.1} parent=43 // pred_check
          %p383 = pneg %p68
        $region46: #{tpu_custom_call.1} parent=43 // pred_check_branch
          %385 = sbr.rel (%p383) target = $region48
        $region47: #{tpu_custom_call.1} parent=43 // pred_region
          %386 = dma.done %s379, 4096
        $region48: #{tpu_custom_call.1} parent=43 // pred_fallthru
          _
        %s387 = sand.u32 %s33, 1
        %s388 = scalar_lea.sflag [#allocation6], %s387
        %s389 = sand.u32 %s81, 1
        %s390 = smul.addr %s389, 128
        %s391 = scalar_lea.vmem [#allocation5], %s390
        // Predicated region
        $region49: #{tpu_custom_call.1} parent=43 // pred_check
          %p392 = pneg %p94
        $region50: #{tpu_custom_call.1} parent=43 // pred_check_branch
          %394 = sbr.rel (%p392) target = $region52
        $region51: #{tpu_custom_call.1} parent=43 // pred_region
          %395 = dma.done %s388, 2048
        $region52: #{tpu_custom_call.1} parent=43 // pred_fallthru
          _
        %s396 = sand.u32 %s33, 1
        %s397 = scalar_lea.sflag [#allocation6], %s396
        %s398 = sand.u32 %s107, 1
        %s399 = smul.addr %s398, 128
        %s400 = scalar_lea.vmem [#allocation7], %s399
        // Predicated region
        $region53: #{tpu_custom_call.1} parent=43 // pred_check
          %p401 = pneg %p120
        $region54: #{tpu_custom_call.1} parent=43 // pred_check_branch
          %403 = sbr.rel (%p401) target = $region56
        $region55: #{tpu_custom_call.1} parent=43 // pred_region
          %404 = dma.done %s397, 2048
        $region56: #{tpu_custom_call.1} parent=43 // pred_fallthru
          _
        // Predicated region
        $region57: #{tpu_custom_call.1} parent=43 // pred_check
          %p405 = pneg %p183
        $region58: #{tpu_custom_call.1} parent=43 // pred_check_branch
          %407 = sbr.rel (%p405) target = $region60
        $region59: #{tpu_custom_call.1} parent=43 // pred_region
          %408 = dma.done [#allocation9], 24576
        $region60: #{tpu_custom_call.1} parent=43 // pred_fallthru
          _
        %s409 = sand.u32 %s55, 1
        %s410 = scalar_lea.sflag [#allocation3], %s409
        %s411 = sand.u32 %s55, 1
        %s412 = smul.addr %s411, 256
        %s413 = scalar_lea.vmem [#allocation2], %s412
        %p414 = pneg %p68
        %p415 = pneg %p65
        %s416 = sand.u32 %s33, 1
        %s417 = scalar_lea.sflag [#allocation6], %s416
        %s418 = sand.u32 %s81, 1
        %s419 = smul.addr %s418, 128
        %s420 = scalar_lea.vmem [#allocation5], %s419
        %p421 = pneg %p94
        %p422 = pneg %p91
        %s423 = sand.u32 %s33, 1
        %s424 = scalar_lea.sflag [#allocation6], %s423
        %s425 = sand.u32 %s107, 1
        %s426 = smul.addr %s425, 128
        %s427 = scalar_lea.vmem [#allocation7], %s426
        %p428 = pneg %p120
        %p429 = pneg %p117
        %p430 = pneg %p141
        %p431 = pneg %p138
        %p432 = pneg %p162
        %p433 = pneg %p159
        %p434 = pneg %p183
        %p435 = pneg %p180
        %p436 = pneg %p211
        %p437 = pneg %p208
        %s438 = sand.u32 %s198, 1
        %s439 = scalar_lea.sflag [#allocation4], %s438
        %s440 = sand.u32 %s198, 1
        %s441 = smul.addr %s440, 256
        %s442 = scalar_lea.vmem [#allocation10], %s441
        %p443 = pneg %p239
        %p444 = pneg %p236
        %s445 = sand.u32 %s33, 1
        %s446 = scalar_lea.sflag [#allocation12], %s445
        %s447 = sand.u32 %s226, 1
        %s448 = smul.addr %s447, 256
        %s449 = scalar_lea.vmem [#allocation11], %s448
        %p450 = pneg %p267
        %p451 = pneg %p264
        %s452 = sand.u32 %s33, 1
        %s453 = scalar_lea.sflag [#allocation12], %s452
        %s454 = sand.u32 %s254, 1
        %s455 = smul.addr %s454, 256
        %s456 = scalar_lea.vmem [#allocation13], %s455
        %s457 = smul.u32 16, %s38
        %s458 = smul.u32 16, %s38
        %s459 = smul.u32 16, %s38
        %s460 = smul.u32 16, %s38
        %s461 = smul.u32 16, %s38
        %v462 = vld [vmem:[%s382] sm:$0xff]
        %v463 = vld [vmem:[%s382 + $0x8] sm:$0xff]
        %v464 = vld [vmem:[%s382 + $0x10] sm:$0xff]
        %v465 = vld [vmem:[%s382 + $0x18] sm:$0xff]
        %v466 = vld [vmem:[%s382 + $0x20] sm:$0xff]
        %v467 = vld [vmem:[%s382 + $0x28] sm:$0xff]
        %v468 = vld [vmem:[%s382 + $0x30] sm:$0xff]
        %v469 = vld [vmem:[%s382 + $0x38] sm:$0xff]
        %v470 = vld [vmem:[%s382 + $0x40] sm:$0xff]
        %v471 = vld [vmem:[%s382 + $0x48] sm:$0xff]
        %v472 = vld [vmem:[%s382 + $0x50] sm:$0xff]
        %v473 = vld [vmem:[%s382 + $0x58] sm:$0xff]
        %v474 = vld [vmem:[%s382 + $0x60] sm:$0xff]
        %v475 = vld [vmem:[%s382 + $0x68] sm:$0xff]
        %v476 = vld [vmem:[%s382 + $0x70] sm:$0xff]
        %v477 = vld [vmem:[%s382 + $0x78] sm:$0xff]
        %v478 = vld [vmem:[%s382 + $0x80] sm:$0xff]
        %v479 = vld [vmem:[%s382 + $0x88] sm:$0xff]
        %v480 = vld [vmem:[%s382 + $0x90] sm:$0xff]
        %v481 = vld [vmem:[%s382 + $0x98] sm:$0xff]
        %v482 = vld [vmem:[%s382 + $0xa0] sm:$0xff]
        %v483 = vld [vmem:[%s382 + $0xa8] sm:$0xff]
        %v484 = vld [vmem:[%s382 + $0xb0] sm:$0xff]
        %v485 = vld [vmem:[%s382 + $0xb8] sm:$0xff]
        %v486 = vld [vmem:[%s382 + $0xc0] sm:$0xff]
        %v487 = vld [vmem:[%s382 + $0xc8] sm:$0xff]
        %v488 = vld [vmem:[%s382 + $0xd0] sm:$0xff]
        %v489 = vld [vmem:[%s382 + $0xd8] sm:$0xff]
        %v490 = vld [vmem:[%s382 + $0xe0] sm:$0xff]
        %v491 = vld [vmem:[%s382 + $0xe8] sm:$0xff]
        %v492 = vld [vmem:[%s382 + $0xf0] sm:$0xff]
        %v493 = vld [vmem:[%s382 + $0xf8] sm:$0xff]
        %v494 = vadd.f32 %v462, %v463
        %495 = vadd.xlane.f32.xlu0 %v494
        %v496 = vpop.xlane.xlu0 %495
        %v497 = vadd.f32 %v464, %v465
        %498 = vadd.xlane.f32.xlu0 %v497
        %v499 = vpop.xlane.xlu0 %498
        %v500 = vadd.f32 %v466, %v467
        %501 = vadd.xlane.f32.xlu0 %v500
        %v502 = vpop.xlane.xlu0 %501
        %v503 = vadd.f32 %v468, %v469
        %504 = vadd.xlane.f32.xlu0 %v503
        %v505 = vpop.xlane.xlu0 %504
        %v506 = vadd.f32 %v470, %v471
        %507 = vadd.xlane.f32.xlu0 %v506
        %v508 = vpop.xlane.xlu0 %507
        %v509 = vadd.f32 %v472, %v473
        %510 = vadd.xlane.f32.xlu0 %v509
        %v511 = vpop.xlane.xlu0 %510
        %v512 = vadd.f32 %v474, %v475
        %513 = vadd.xlane.f32.xlu0 %v512
        %v514 = vpop.xlane.xlu0 %513
        %v515 = vadd.f32 %v476, %v477
        %516 = vadd.xlane.f32.xlu0 %v515
        %v517 = vpop.xlane.xlu0 %516
        %v518 = vadd.f32 %v478, %v479
        %519 = vadd.xlane.f32.xlu0 %v518
        %v520 = vpop.xlane.xlu0 %519
        %v521 = vadd.f32 %v480, %v481
        %522 = vadd.xlane.f32.xlu0 %v521
        %v523 = vpop.xlane.xlu0 %522
        %v524 = vadd.f32 %v482, %v483
        %525 = vadd.xlane.f32.xlu0 %v524
        %v526 = vpop.xlane.xlu0 %525
        %v527 = vadd.f32 %v484, %v485
        %528 = vadd.xlane.f32.xlu0 %v527
        %v529 = vpop.xlane.xlu0 %528
        %v530 = vadd.f32 %v486, %v487
        %531 = vadd.xlane.f32.xlu0 %v530
        %v532 = vpop.xlane.xlu0 %531
        %v533 = vadd.f32 %v488, %v489
        %534 = vadd.xlane.f32.xlu0 %v533
        %v535 = vpop.xlane.xlu0 %534
        %v536 = vadd.f32 %v490, %v491
        %537 = vadd.xlane.f32.xlu0 %v536
        %v538 = vpop.xlane.xlu0 %537
        %v539 = vadd.f32 %v492, %v493
        %540 = vadd.xlane.f32.xlu0 %v539
        %v541 = vpop.xlane.xlu0 %540
        %v542 = vrcp.pop 256.0
        %v543 = vmul.f32 %v496, %v542
        %v544 = vmul.f32 %v499, %v542
        %v545 = vmul.f32 %v502, %v542
        %v546 = vmul.f32 %v505, %v542
        %v547 = vmul.f32 %v508, %v542
        %v548 = vmul.f32 %v511, %v542
        %v549 = vmul.f32 %v514, %v542
        %v550 = vmul.f32 %v517, %v542
        %v551 = vmul.f32 %v520, %v542
        %v552 = vmul.f32 %v523, %v542
        %v553 = vmul.f32 %v526, %v542
        %v554 = vmul.f32 %v529, %v542
        %v555 = vmul.f32 %v532, %v542
        %v556 = vmul.f32 %v535, %v542
        %v557 = vmul.f32 %v538, %v542
        %v558 = vmul.f32 %v541, %v542
        %v559 = vsub.f32 %v462, %v543
        %v560 = vsub.f32 %v463, %v543
        %v561 = vsub.f32 %v464, %v544
        %v562 = vsub.f32 %v465, %v544
        %v563 = vsub.f32 %v466, %v545
        %v564 = vsub.f32 %v467, %v545
        %v565 = vsub.f32 %v468, %v546
        %v566 = vsub.f32 %v469, %v546
        %v567 = vsub.f32 %v470, %v547
        %v568 = vsub.f32 %v471, %v547
        %v569 = vsub.f32 %v472, %v548
        %v570 = vsub.f32 %v473, %v548
        %v571 = vsub.f32 %v474, %v549
        %v572 = vsub.f32 %v475, %v549
        %v573 = vsub.f32 %v476, %v550
        %v574 = vsub.f32 %v477, %v550
        %v575 = vsub.f32 %v478, %v551
        %v576 = vsub.f32 %v479, %v551
        %v577 = vsub.f32 %v480, %v552
        %v578 = vsub.f32 %v481, %v552
        %v579 = vsub.f32 %v482, %v553
        %v580 = vsub.f32 %v483, %v553
        %v581 = vsub.f32 %v484, %v554
        %v582 = vsub.f32 %v485, %v554
        %v583 = vsub.f32 %v486, %v555
        %v584 = vsub.f32 %v487, %v555
        %v585 = vsub.f32 %v488, %v556
        %v586 = vsub.f32 %v489, %v556
        %v587 = vsub.f32 %v490, %v557
        %v588 = vsub.f32 %v491, %v557
        %v589 = vsub.f32 %v492, %v558
        %v590 = vsub.f32 %v493, %v558
        %v591 = vmul.f32 %v559, %v559
        %v592 = vmul.f32 %v560, %v560
        %v593 = vmul.f32 %v561, %v561
        %v594 = vmul.f32 %v562, %v562
        %v595 = vmul.f32 %v563, %v563
        %v596 = vmul.f32 %v564, %v564
        %v597 = vmul.f32 %v565, %v565
        %v598 = vmul.f32 %v566, %v566
        %v599 = vmul.f32 %v567, %v567
        %v600 = vmul.f32 %v568, %v568
        %v601 = vmul.f32 %v569, %v569
        %v602 = vmul.f32 %v570, %v570
        %v603 = vmul.f32 %v571, %v571
        %v604 = vmul.f32 %v572, %v572
        %v605 = vmul.f32 %v573, %v573
        %v606 = vmul.f32 %v574, %v574
        %v607 = vmul.f32 %v575, %v575
        %v608 = vmul.f32 %v576, %v576
        %v609 = vmul.f32 %v577, %v577
        %v610 = vmul.f32 %v578, %v578
        %v611 = vmul.f32 %v579, %v579
        %v612 = vmul.f32 %v580, %v580
        %v613 = vmul.f32 %v581, %v581
        %v614 = vmul.f32 %v582, %v582
        %v615 = vmul.f32 %v583, %v583
        %v616 = vmul.f32 %v584, %v584
        %v617 = vmul.f32 %v585, %v585
        %v618 = vmul.f32 %v586, %v586
        %v619 = vmul.f32 %v587, %v587
        %v620 = vmul.f32 %v588, %v588
        %v621 = vmul.f32 %v589, %v589
        %v622 = vmul.f32 %v590, %v590
        %v623 = vadd.f32 %v591, %v592
        %624 = vadd.xlane.f32.xlu0 %v623
        %v625 = vpop.xlane.xlu0 %624
        %v626 = vadd.f32 %v593, %v594
        %627 = vadd.xlane.f32.xlu0 %v626
        %v628 = vpop.xlane.xlu0 %627
        %v629 = vadd.f32 %v595, %v596
        %630 = vadd.xlane.f32.xlu0 %v629
        %v631 = vpop.xlane.xlu0 %630
        %v632 = vadd.f32 %v597, %v598
        %633 = vadd.xlane.f32.xlu0 %v632
        %v634 = vpop.xlane.xlu0 %633
        %v635 = vadd.f32 %v599, %v600
        %636 = vadd.xlane.f32.xlu0 %v635
        %v637 = vpop.xlane.xlu0 %636
        %v638 = vadd.f32 %v601, %v602
        %639 = vadd.xlane.f32.xlu0 %v638
        %v640 = vpop.xlane.xlu0 %639
        %v641 = vadd.f32 %v603, %v604
        %642 = vadd.xlane.f32.xlu0 %v641
        %v643 = vpop.xlane.xlu0 %642
        %v644 = vadd.f32 %v605, %v606
        %645 = vadd.xlane.f32.xlu0 %v644
        %v646 = vpop.xlane.xlu0 %645
        %v647 = vadd.f32 %v607, %v608
        %648 = vadd.xlane.f32.xlu0 %v647
        %v649 = vpop.xlane.xlu0 %648
        %v650 = vadd.f32 %v609, %v610
        %651 = vadd.xlane.f32.xlu0 %v650
        %v652 = vpop.xlane.xlu0 %651
        %v653 = vadd.f32 %v611, %v612
        %654 = vadd.xlane.f32.xlu0 %v653
        %v655 = vpop.xlane.xlu0 %654
        %v656 = vadd.f32 %v613, %v614
        %657 = vadd.xlane.f32.xlu0 %v656
        %v658 = vpop.xlane.xlu0 %657
        %v659 = vadd.f32 %v615, %v616
        %660 = vadd.xlane.f32.xlu0 %v659
        %v661 = vpop.xlane.xlu0 %660
        %v662 = vadd.f32 %v617, %v618
        %663 = vadd.xlane.f32.xlu0 %v662
        %v664 = vpop.xlane.xlu0 %663
        %v665 = vadd.f32 %v619, %v620
        %666 = vadd.xlane.f32.xlu0 %v665
        %v667 = vpop.xlane.xlu0 %666
        %v668 = vadd.f32 %v621, %v622
        %669 = vadd.xlane.f32.xlu0 %v668
        %v670 = vpop.xlane.xlu0 %669
        %v671 = vmul.f32 %v625, %v542
        %v672 = vmul.f32 %v628, %v542
        %v673 = vmul.f32 %v631, %v542
        %v674 = vmul.f32 %v634, %v542
        %v675 = vmul.f32 %v637, %v542
        %v676 = vmul.f32 %v640, %v542
        %v677 = vmul.f32 %v643, %v542
        %v678 = vmul.f32 %v646, %v542
        %v679 = vmul.f32 %v649, %v542
        %v680 = vmul.f32 %v652, %v542
        %v681 = vmul.f32 %v655, %v542
        %v682 = vmul.f32 %v658, %v542
        %v683 = vmul.f32 %v661, %v542
        %v684 = vmul.f32 %v664, %v542
        %v685 = vmul.f32 %v667, %v542
        %v686 = vmul.f32 %v670, %v542
        %v687 = vadd.f32 %v671, 1e-05
        %v688 = vadd.f32 %v672, 1e-05
        %v689 = vadd.f32 %v673, 1e-05
        %v690 = vadd.f32 %v674, 1e-05
        %v691 = vadd.f32 %v675, 1e-05
        %v692 = vadd.f32 %v676, 1e-05
        %v693 = vadd.f32 %v677, 1e-05
        %v694 = vadd.f32 %v678, 1e-05
        %v695 = vadd.f32 %v679, 1e-05
        %v696 = vadd.f32 %v680, 1e-05
        %v697 = vadd.f32 %v681, 1e-05
        %v698 = vadd.f32 %v682, 1e-05
        %v699 = vadd.f32 %v683, 1e-05
        %v700 = vadd.f32 %v684, 1e-05
        %v701 = vadd.f32 %v685, 1e-05
        %v702 = vadd.f32 %v686, 1e-05
        %v703 = vrsqrt.pop %v687
        %v704 = vrsqrt.pop %v688
        %v705 = vrsqrt.pop %v689
        %v706 = vrsqrt.pop %v690
        %v707 = vrsqrt.pop %v691
        %v708 = vrsqrt.pop %v692
        %v709 = vrsqrt.pop %v693
        %v710 = vrsqrt.pop %v694
        %v711 = vrsqrt.pop %v695
        %v712 = vrsqrt.pop %v696
        %v713 = vrsqrt.pop %v697
        %v714 = vrsqrt.pop %v698
        %v715 = vrsqrt.pop %v699
        %v716 = vrsqrt.pop %v700
        %v717 = vrsqrt.pop %v701
        %v718 = vrsqrt.pop %v702
        %v719 = vmul.f32 %v559, %v703
        %v720 = vmul.f32 %v560, %v703
        %v721 = vmul.f32 %v561, %v704
        %v722 = vmul.f32 %v562, %v704
        %v723 = vmul.f32 %v563, %v705
        %v724 = vmul.f32 %v564, %v705
        %v725 = vmul.f32 %v565, %v706
        %v726 = vmul.f32 %v566, %v706
        %v727 = vmul.f32 %v567, %v707
        %v728 = vmul.f32 %v568, %v707
        %v729 = vmul.f32 %v569, %v708
        %v730 = vmul.f32 %v570, %v708
        %v731 = vmul.f32 %v571, %v709
        %v732 = vmul.f32 %v572, %v709
        %v733 = vmul.f32 %v573, %v710
        %v734 = vmul.f32 %v574, %v710
        %v735 = vmul.f32 %v575, %v711
        %v736 = vmul.f32 %v576, %v711
        %v737 = vmul.f32 %v577, %v712
        %v738 = vmul.f32 %v578, %v712
        %v739 = vmul.f32 %v579, %v713
        %v740 = vmul.f32 %v580, %v713
        %v741 = vmul.f32 %v581, %v714
        %v742 = vmul.f32 %v582, %v714
        %v743 = vmul.f32 %v583, %v715
        %v744 = vmul.f32 %v584, %v715
        %v745 = vmul.f32 %v585, %v716
        %v746 = vmul.f32 %v586, %v716
        %v747 = vmul.f32 %v587, %v717
        %v748 = vmul.f32 %v588, %v717
        %v749 = vmul.f32 %v589, %v718
        %v750 = vmul.f32 %v590, %v718
        %v751 = vld [vmem:[%s3] sm:$0x3]
        %v753 = vlaneseq
        %v754 = vshrl.u32 %v753, 7
        %v755 = vsub.s32 0, %v754
        %v756 = vrot.slane %v751, %v755
        %v757 = vlaneseq
        %v758 = vshrl.u32 %v757, 7
        %v759 = vsub.s32 1, %v758
        %v760 = vrot.slane %v751, %v759
        %v763 = vmul.f32 %v719, %v756
        %v764 = vmul.f32 %v720, %v760
        %v765 = vmul.f32 %v721, %v756
        %v766 = vmul.f32 %v722, %v760
        %v767 = vmul.f32 %v723, %v756
        %v768 = vmul.f32 %v724, %v760
        %v769 = vmul.f32 %v725, %v756
        %v770 = vmul.f32 %v726, %v760
        %v771 = vmul.f32 %v727, %v756
        %v772 = vmul.f32 %v728, %v760
        %v773 = vmul.f32 %v729, %v756
        %v774 = vmul.f32 %v730, %v760
        %v775 = vmul.f32 %v731, %v756
        %v776 = vmul.f32 %v732, %v760
        %v777 = vmul.f32 %v733, %v756
        %v778 = vmul.f32 %v734, %v760
        %v779 = vmul.f32 %v735, %v756
        %v780 = vmul.f32 %v736, %v760
        %v781 = vmul.f32 %v737, %v756
        %v782 = vmul.f32 %v738, %v760
        %v783 = vmul.f32 %v739, %v756
        %v784 = vmul.f32 %v740, %v760
        %v785 = vmul.f32 %v741, %v756
        %v786 = vmul.f32 %v742, %v760
        %v787 = vmul.f32 %v743, %v756
        %v788 = vmul.f32 %v744, %v760
        %v789 = vmul.f32 %v745, %v756
        %v790 = vmul.f32 %v746, %v760
        %v791 = vmul.f32 %v747, %v756
        %v792 = vmul.f32 %v748, %v760
        %v793 = vmul.f32 %v749, %v756
        %v794 = vmul.f32 %v750, %v760
        %v795 = vld [vmem:[%s4] sm:$0x3]
        %v797 = vlaneseq
        %v798 = vshrl.u32 %v797, 7
        %v799 = vsub.s32 0, %v798
        %v800 = vrot.slane %v795, %v799
        %v801 = vlaneseq
        %v802 = vshrl.u32 %v801, 7
        %v803 = vsub.s32 1, %v802
        %v804 = vrot.slane %v795, %v803
        %v807 = vadd.f32 %v763, %v800
        %v808 = vadd.f32 %v764, %v804
        %v809 = vadd.f32 %v765, %v800
        %v810 = vadd.f32 %v766, %v804
        %v811 = vadd.f32 %v767, %v800
        %v812 = vadd.f32 %v768, %v804
        %v813 = vadd.f32 %v769, %v800
        %v814 = vadd.f32 %v770, %v804
        %v815 = vadd.f32 %v771, %v800
        %v816 = vadd.f32 %v772, %v804
        %v817 = vadd.f32 %v773, %v800
        %v818 = vadd.f32 %v774, %v804
        %v819 = vadd.f32 %v775, %v800
        %v820 = vadd.f32 %v776, %v804
        %v821 = vadd.f32 %v777, %v800
        %v822 = vadd.f32 %v778, %v804
        %v823 = vadd.f32 %v779, %v800
        %v824 = vadd.f32 %v780, %v804
        %v825 = vadd.f32 %v781, %v800
        %v826 = vadd.f32 %v782, %v804
        %v827 = vadd.f32 %v783, %v800
        %v828 = vadd.f32 %v784, %v804
        %v829 = vadd.f32 %v785, %v800
        %v830 = vadd.f32 %v786, %v804
        %v831 = vadd.f32 %v787, %v800
        %v832 = vadd.f32 %v788, %v804
        %v833 = vadd.f32 %v789, %v800
        %v834 = vadd.f32 %v790, %v804
        %v835 = vadd.f32 %v791, %v800
        %v836 = vadd.f32 %v792, %v804
        %v837 = vadd.f32 %v793, %v800
        %v838 = vadd.f32 %v794, %v804
        %v839 = vld [vmem:[#allocation8] sm:$0xff]
        %v840 = vld [vmem:[#allocation8 + $0x8] sm:$0xff]
        %v841 = vld [vmem:[#allocation8 + $0x10] sm:$0xff]
        %v842 = vld [vmem:[#allocation8 + $0x18] sm:$0xff]
        %v843 = vld [vmem:[#allocation8 + $0x20] sm:$0xff]
        %v844 = vld [vmem:[#allocation8 + $0x28] sm:$0xff]
        %v845 = vld [vmem:[#allocation8 + $0x30] sm:$0xff]
        %v846 = vld [vmem:[#allocation8 + $0x38] sm:$0xff]
        %v847 = vld [vmem:[#allocation8 + $0x40] sm:$0xff]
        %v848 = vld [vmem:[#allocation8 + $0x48] sm:$0xff]
        %v849 = vld [vmem:[#allocation8 + $0x50] sm:$0xff]
        %v850 = vld [vmem:[#allocation8 + $0x58] sm:$0xff]
        %v851 = vld [vmem:[#allocation8 + $0x60] sm:$0xff]
        %v852 = vld [vmem:[#allocation8 + $0x68] sm:$0xff]
        %v853 = vld [vmem:[#allocation8 + $0x70] sm:$0xff]
        %v854 = vld [vmem:[#allocation8 + $0x78] sm:$0xff]
        %v855 = vld [vmem:[#allocation8 + $0x80] sm:$0xff]
        %v856 = vld [vmem:[#allocation8 + $0x88] sm:$0xff]
        %v857 = vld [vmem:[#allocation8 + $0x90] sm:$0xff]
        %v858 = vld [vmem:[#allocation8 + $0x98] sm:$0xff]
        %v859 = vld [vmem:[#allocation8 + $0xa0] sm:$0xff]
        %v860 = vld [vmem:[#allocation8 + $0xa8] sm:$0xff]
        %v861 = vld [vmem:[#allocation8 + $0xb0] sm:$0xff]
        %v862 = vld [vmem:[#allocation8 + $0xb8] sm:$0xff]
        %v863 = vld [vmem:[#allocation8 + $0xc0] sm:$0xff]
        %v864 = vld [vmem:[#allocation8 + $0xc8] sm:$0xff]
        %v865 = vld [vmem:[#allocation8 + $0xd0] sm:$0xff]
        %v866 = vld [vmem:[#allocation8 + $0xd8] sm:$0xff]
        %v867 = vld [vmem:[#allocation8 + $0xe0] sm:$0xff]
        %v868 = vld [vmem:[#allocation8 + $0xe8] sm:$0xff]
        %v869 = vld [vmem:[#allocation8 + $0xf0] sm:$0xff]
        %v870 = vld [vmem:[#allocation8 + $0xf8] sm:$0xff]
        %v871 = vld [vmem:[#allocation8 + $0x100] sm:$0xff]
        %v872 = vld [vmem:[#allocation8 + $0x108] sm:$0xff]
        %v873 = vld [vmem:[#allocation8 + $0x110] sm:$0xff]
        %v874 = vld [vmem:[#allocation8 + $0x118] sm:$0xff]
        %v875 = vld [vmem:[#allocation8 + $0x120] sm:$0xff]
        %v876 = vld [vmem:[#allocation8 + $0x128] sm:$0xff]
        %v877 = vld [vmem:[#allocation8 + $0x130] sm:$0xff]
        %v878 = vld [vmem:[#allocation8 + $0x138] sm:$0xff]
        %v879 = vld [vmem:[#allocation8 + $0x140] sm:$0xff]
        %v880 = vld [vmem:[#allocation8 + $0x148] sm:$0xff]
        %v881 = vld [vmem:[#allocation8 + $0x150] sm:$0xff]
        %v882 = vld [vmem:[#allocation8 + $0x158] sm:$0xff]
        %v883 = vld [vmem:[#allocation8 + $0x160] sm:$0xff]
        %v884 = vld [vmem:[#allocation8 + $0x168] sm:$0xff]
        %v885 = vld [vmem:[#allocation8 + $0x170] sm:$0xff]
        %v886 = vld [vmem:[#allocation8 + $0x178] sm:$0xff]
        %v887 = vld [vmem:[#allocation8 + $0x180] sm:$0xff]
        %v888 = vld [vmem:[#allocation8 + $0x188] sm:$0xff]
        %v889 = vld [vmem:[#allocation8 + $0x190] sm:$0xff]
        %v890 = vld [vmem:[#allocation8 + $0x198] sm:$0xff]
        %v891 = vld [vmem:[#allocation8 + $0x1a0] sm:$0xff]
        %v892 = vld [vmem:[#allocation8 + $0x1a8] sm:$0xff]
        %v893 = vld [vmem:[#allocation8 + $0x1b0] sm:$0xff]
        %v894 = vld [vmem:[#allocation8 + $0x1b8] sm:$0xff]
        %v895 = vld [vmem:[#allocation8 + $0x1c0] sm:$0xff]
        %v896 = vld [vmem:[#allocation8 + $0x1c8] sm:$0xff]
        %v897 = vld [vmem:[#allocation8 + $0x1d0] sm:$0xff]
        %v898 = vld [vmem:[#allocation8 + $0x1d8] sm:$0xff]
        %v899 = vld [vmem:[#allocation8 + $0x1e0] sm:$0xff]
        %v900 = vld [vmem:[#allocation8 + $0x1e8] sm:$0xff]
        %v901 = vld [vmem:[#allocation8 + $0x1f0] sm:$0xff]
        %v902 = vld [vmem:[#allocation8 + $0x1f8] sm:$0xff]
        %v903 = vld [vmem:[#allocation8 + $0x200] sm:$0xff]
        %v904 = vld [vmem:[#allocation8 + $0x208] sm:$0xff]
        %v905 = vld [vmem:[#allocation8 + $0x210] sm:$0xff]
        %v906 = vld [vmem:[#allocation8 + $0x218] sm:$0xff]
        %v907 = vld [vmem:[#allocation8 + $0x220] sm:$0xff]
        %v908 = vld [vmem:[#allocation8 + $0x228] sm:$0xff]
        %v909 = vld [vmem:[#allocation8 + $0x230] sm:$0xff]
        %v910 = vld [vmem:[#allocation8 + $0x238] sm:$0xff]
        %v911 = vld [vmem:[#allocation8 + $0x240] sm:$0xff]
        %v912 = vld [vmem:[#allocation8 + $0x248] sm:$0xff]
        %v913 = vld [vmem:[#allocation8 + $0x250] sm:$0xff]
        %v914 = vld [vmem:[#allocation8 + $0x258] sm:$0xff]
        %v915 = vld [vmem:[#allocation8 + $0x260] sm:$0xff]
        %v916 = vld [vmem:[#allocation8 + $0x268] sm:$0xff]
        %v917 = vld [vmem:[#allocation8 + $0x270] sm:$0xff]
        %v918 = vld [vmem:[#allocation8 + $0x278] sm:$0xff]
        %v919 = vld [vmem:[#allocation8 + $0x280] sm:$0xff]
        %v920 = vld [vmem:[#allocation8 + $0x288] sm:$0xff]
        %v921 = vld [vmem:[#allocation8 + $0x290] sm:$0xff]
        %v922 = vld [vmem:[#allocation8 + $0x298] sm:$0xff]
        %v923 = vld [vmem:[#allocation8 + $0x2a0] sm:$0xff]
        %v924 = vld [vmem:[#allocation8 + $0x2a8] sm:$0xff]
        %v925 = vld [vmem:[#allocation8 + $0x2b0] sm:$0xff]
        %v926 = vld [vmem:[#allocation8 + $0x2b8] sm:$0xff]
        %v927 = vld [vmem:[#allocation8 + $0x2c0] sm:$0xff]
        %v928 = vld [vmem:[#allocation8 + $0x2c8] sm:$0xff]
        %v929 = vld [vmem:[#allocation8 + $0x2d0] sm:$0xff]
        %v930 = vld [vmem:[#allocation8 + $0x2d8] sm:$0xff]
        %v931 = vld [vmem:[#allocation8 + $0x2e0] sm:$0xff]
        %v932 = vld [vmem:[#allocation8 + $0x2e8] sm:$0xff]
        %v933 = vld [vmem:[#allocation8 + $0x2f0] sm:$0xff]
        %v934 = vld [vmem:[#allocation8 + $0x2f8] sm:$0xff]
        %v935 = vld [vmem:[#allocation8 + $0x300] sm:$0xff]
        %v936 = vld [vmem:[#allocation8 + $0x308] sm:$0xff]
        %v937 = vld [vmem:[#allocation8 + $0x310] sm:$0xff]
        %v938 = vld [vmem:[#allocation8 + $0x318] sm:$0xff]
        %v939 = vld [vmem:[#allocation8 + $0x320] sm:$0xff]
        %v940 = vld [vmem:[#allocation8 + $0x328] sm:$0xff]
        %v941 = vld [vmem:[#allocation8 + $0x330] sm:$0xff]
        %v942 = vld [vmem:[#allocation8 + $0x338] sm:$0xff]
        %v943 = vld [vmem:[#allocation8 + $0x340] sm:$0xff]
        %v944 = vld [vmem:[#allocation8 + $0x348] sm:$0xff]
        %v945 = vld [vmem:[#allocation8 + $0x350] sm:$0xff]
        %v946 = vld [vmem:[#allocation8 + $0x358] sm:$0xff]
        %v947 = vld [vmem:[#allocation8 + $0x360] sm:$0xff]
        %v948 = vld [vmem:[#allocation8 + $0x368] sm:$0xff]
        %v949 = vld [vmem:[#allocation8 + $0x370] sm:$0xff]
        %v950 = vld [vmem:[#allocation8 + $0x378] sm:$0xff]
        %v951 = vld [vmem:[#allocation8 + $0x380] sm:$0xff]
        %v952 = vld [vmem:[#allocation8 + $0x388] sm:$0xff]
        %v953 = vld [vmem:[#allocation8 + $0x390] sm:$0xff]
        %v954 = vld [vmem:[#allocation8 + $0x398] sm:$0xff]
        %v955 = vld [vmem:[#allocation8 + $0x3a0] sm:$0xff]
        %v956 = vld [vmem:[#allocation8 + $0x3a8] sm:$0xff]
        %v957 = vld [vmem:[#allocation8 + $0x3b0] sm:$0xff]
        %v958 = vld [vmem:[#allocation8 + $0x3b8] sm:$0xff]
        %v959 = vld [vmem:[#allocation8 + $0x3c0] sm:$0xff]
        %v960 = vld [vmem:[#allocation8 + $0x3c8] sm:$0xff]
        %v961 = vld [vmem:[#allocation8 + $0x3d0] sm:$0xff]
        %v962 = vld [vmem:[#allocation8 + $0x3d8] sm:$0xff]
        %v963 = vld [vmem:[#allocation8 + $0x3e0] sm:$0xff]
        %v964 = vld [vmem:[#allocation8 + $0x3e8] sm:$0xff]
        %v965 = vld [vmem:[#allocation8 + $0x3f0] sm:$0xff]
        %v966 = vld [vmem:[#allocation8 + $0x3f8] sm:$0xff]
        %v967 = vld [vmem:[#allocation8 + $0x400] sm:$0xff]
        %v968 = vld [vmem:[#allocation8 + $0x408] sm:$0xff]
        %v969 = vld [vmem:[#allocation8 + $0x410] sm:$0xff]
        %v970 = vld [vmem:[#allocation8 + $0x418] sm:$0xff]
        %v971 = vld [vmem:[#allocation8 + $0x420] sm:$0xff]
        %v972 = vld [vmem:[#allocation8 + $0x428] sm:$0xff]
        %v973 = vld [vmem:[#allocation8 + $0x430] sm:$0xff]
        %v974 = vld [vmem:[#allocation8 + $0x438] sm:$0xff]
        %v975 = vld [vmem:[#allocation8 + $0x440] sm:$0xff]
        %v976 = vld [vmem:[#allocation8 + $0x448] sm:$0xff]
        %v977 = vld [vmem:[#allocation8 + $0x450] sm:$0xff]
        %v978 = vld [vmem:[#allocation8 + $0x458] sm:$0xff]
        %v979 = vld [vmem:[#allocation8 + $0x460] sm:$0xff]
        %v980 = vld [vmem:[#allocation8 + $0x468] sm:$0xff]
        %v981 = vld [vmem:[#allocation8 + $0x470] sm:$0xff]
        %v982 = vld [vmem:[#allocation8 + $0x478] sm:$0xff]
        %v983 = vld [vmem:[#allocation8 + $0x480] sm:$0xff]
        %v984 = vld [vmem:[#allocation8 + $0x488] sm:$0xff]
        %v985 = vld [vmem:[#allocation8 + $0x490] sm:$0xff]
        %v986 = vld [vmem:[#allocation8 + $0x498] sm:$0xff]
        %v987 = vld [vmem:[#allocation8 + $0x4a0] sm:$0xff]
        %v988 = vld [vmem:[#allocation8 + $0x4a8] sm:$0xff]
        %v989 = vld [vmem:[#allocation8 + $0x4b0] sm:$0xff]
        %v990 = vld [vmem:[#allocation8 + $0x4b8] sm:$0xff]
        %v991 = vld [vmem:[#allocation8 + $0x4c0] sm:$0xff]
        %v992 = vld [vmem:[#allocation8 + $0x4c8] sm:$0xff]
        %v993 = vld [vmem:[#allocation8 + $0x4d0] sm:$0xff]
        %v994 = vld [vmem:[#allocation8 + $0x4d8] sm:$0xff]
        %v995 = vld [vmem:[#allocation8 + $0x4e0] sm:$0xff]
        %v996 = vld [vmem:[#allocation8 + $0x4e8] sm:$0xff]
        %v997 = vld [vmem:[#allocation8 + $0x4f0] sm:$0xff]
        %v998 = vld [vmem:[#allocation8 + $0x4f8] sm:$0xff]
        %v999 = vld [vmem:[#allocation8 + $0x500] sm:$0xff]
        %v1000 = vld [vmem:[#allocation8 + $0x508] sm:$0xff]
        %v1001 = vld [vmem:[#allocation8 + $0x510] sm:$0xff]
        %v1002 = vld [vmem:[#allocation8 + $0x518] sm:$0xff]
        %v1003 = vld [vmem:[#allocation8 + $0x520] sm:$0xff]
        %v1004 = vld [vmem:[#allocation8 + $0x528] sm:$0xff]
        %v1005 = vld [vmem:[#allocation8 + $0x530] sm:$0xff]
        %v1006 = vld [vmem:[#allocation8 + $0x538] sm:$0xff]
        %v1007 = vld [vmem:[#allocation8 + $0x540] sm:$0xff]
        %v1008 = vld [vmem:[#allocation8 + $0x548] sm:$0xff]
        %v1009 = vld [vmem:[#allocation8 + $0x550] sm:$0xff]
        %v1010 = vld [vmem:[#allocation8 + $0x558] sm:$0xff]
        %v1011 = vld [vmem:[#allocation8 + $0x560] sm:$0xff]
        %v1012 = vld [vmem:[#allocation8 + $0x568] sm:$0xff]
        %v1013 = vld [vmem:[#allocation8 + $0x570] sm:$0xff]
        %v1014 = vld [vmem:[#allocation8 + $0x578] sm:$0xff]
        %v1015 = vld [vmem:[#allocation8 + $0x580] sm:$0xff]
        %v1016 = vld [vmem:[#allocation8 + $0x588] sm:$0xff]
        %v1017 = vld [vmem:[#allocation8 + $0x590] sm:$0xff]
        %v1018 = vld [vmem:[#allocation8 + $0x598] sm:$0xff]
        %v1019 = vld [vmem:[#allocation8 + $0x5a0] sm:$0xff]
        %v1020 = vld [vmem:[#allocation8 + $0x5a8] sm:$0xff]
        %v1021 = vld [vmem:[#allocation8 + $0x5b0] sm:$0xff]
        %v1022 = vld [vmem:[#allocation8 + $0x5b8] sm:$0xff]
        %v1023 = vld [vmem:[#allocation8 + $0x5c0] sm:$0xff]
        %v1024 = vld [vmem:[#allocation8 + $0x5c8] sm:$0xff]
        %v1025 = vld [vmem:[#allocation8 + $0x5d0] sm:$0xff]
        %v1026 = vld [vmem:[#allocation8 + $0x5d8] sm:$0xff]
        %v1027 = vld [vmem:[#allocation8 + $0x5e0] sm:$0xff]
        %v1028 = vld [vmem:[#allocation8 + $0x5e8] sm:$0xff]
        %v1029 = vld [vmem:[#allocation8 + $0x5f0] sm:$0xff]
        %v1030 = vld [vmem:[#allocation8 + $0x5f8] sm:$0xff]
        %1031 = vmatprep.subr.mxu0 %v930
        %1032 = vmatpush1.msra.mxu0 %v929
        %1033 = vmatprep.subr.mxu0 %v924
        %1034 = vmatpush1.msra.mxu0 %v923
        %1035 = vmatprep.subr.mxu0 %v918
        %1036 = vmatpush1.msra.mxu0 %v917
        %1037 = vmatprep.subr.mxu0 %v912
        %1038 = vmatpush1.msra.mxu0 %v911
        %1039 = vmatprep.subr.mxu0 %v906
        %1040 = vmatpush1.msra.mxu0 %v905
        %1041 = vmatprep.subr.mxu0 %v900
        %1042 = vmatpush1.msra.mxu0 %v899
        %1043 = vmatprep.subr.mxu0 %v894
        %1044 = vmatpush1.msra.mxu0 %v893
        %1045 = vmatprep.subr.mxu0 %v888
        %1046 = vmatpush1.msra.mxu0 %v887
        %1047 = vmatprep.subr.mxu0 %v882
        %1048 = vmatpush1.msra.mxu0 %v881
        %1049 = vmatprep.subr.mxu0 %v876
        %1050 = vmatpush1.msra.mxu0 %v875
        %1051 = vmatprep.subr.mxu0 %v870
        %1052 = vmatpush1.msra.mxu0 %v869
        %1053 = vmatprep.subr.mxu0 %v864
        %1054 = vmatpush1.msra.mxu0 %v863
        %1055 = vmatprep.subr.mxu0 %v858
        %1056 = vmatpush1.msra.mxu0 %v857
        %1057 = vmatprep.subr.mxu0 %v852
        %1058 = vmatpush1.msra.mxu0 %v851
        %1059 = vmatprep.subr.mxu0 %v846
        %1060 = vmatpush1.msra.mxu0 %v845
        %1061 = vmatprep.subr.mxu0 %v840
        %1062 = vmatpush1.msra.mxu0 %v839
        %1063 = vmatprep.subr.mxu0 %v1026
        %1064 = vmatpush2.msra.mxu0 %v1025
        %1065 = vmatprep.subr.mxu0 %v1020
        %1066 = vmatpush2.msra.mxu0 %v1019
        %1067 = vmatprep.subr.mxu0 %v1014
        %1068 = vmatpush2.msra.mxu0 %v1013
        %1069 = vmatprep.subr.mxu0 %v1008
        %1070 = vmatpush2.msra.mxu0 %v1007
        %1071 = vmatprep.subr.mxu0 %v1002
        %1072 = vmatpush2.msra.mxu0 %v1001
        %1073 = vmatprep.subr.mxu0 %v996
        %1074 = vmatpush2.msra.mxu0 %v995
        %1075 = vmatprep.subr.mxu0 %v990
        %1076 = vmatpush2.msra.mxu0 %v989
        %1077 = vmatprep.subr.mxu0 %v984
        %1078 = vmatpush2.msra.mxu0 %v983
        %1079 = vmatprep.subr.mxu0 %v978
        %1080 = vmatpush2.msra.mxu0 %v977
        %1081 = vmatprep.subr.mxu0 %v972
        %1082 = vmatpush2.msra.mxu0 %v971
        %1083 = vmatprep.subr.mxu0 %v966
        %1084 = vmatpush2.msra.mxu0 %v965
        %1085 = vmatprep.subr.mxu0 %v960
        %1086 = vmatpush2.msra.mxu0 %v959
        %1087 = vmatprep.subr.mxu0 %v954
        %1088 = vmatpush2.msra.mxu0 %v953
        %1089 = vmatprep.subr.mxu0 %v948
        %1090 = vmatpush2.msra.mxu0 %v947
        %1091 = vmatprep.subr.mxu0 %v942
        %1092 = vmatpush2.msra.mxu0 %v941
        %1093 = vmatprep.subr.mxu0 %v936
        %1094 = vmatpush2.msra.mxu0 %v935
        %1095 = vmatprep.mubr.f32.mxu0 %v808
        %1096 = vmatmul.mubr.f32.gmra.mxu0 %v807
        %v1097 = vpop.f32.mrf.mxu0
        %v1098 = vadd.f32 0.0, %v1097
        %v1099 = vpop.f32.mrf.mxu0
        %v1100 = vadd.f32 0.0, %v1099
        %1101 = vmatprep.mubr.f32.mxu0 %v810
        %1102 = vmatmul.mubr.f32.gmra.mxu0 %v809
        %v1103 = vpop.f32.mrf.mxu0
        %v1104 = vadd.f32 0.0, %v1103
        %v1105 = vpop.f32.mrf.mxu0
        %v1106 = vadd.f32 0.0, %v1105
        %1107 = vmatprep.mubr.f32.mxu0 %v812
        %1108 = vmatmul.mubr.f32.gmra.mxu0 %v811
        %v1109 = vpop.f32.mrf.mxu0
        %v1110 = vadd.f32 0.0, %v1109
        %v1111 = vpop.f32.mrf.mxu0
        %v1112 = vadd.f32 0.0, %v1111
        %1113 = vmatprep.mubr.f32.mxu0 %v814
        %1114 = vmatmul.mubr.f32.gmra.mxu0 %v813
        %v1115 = vpop.f32.mrf.mxu0
        %v1116 = vadd.f32 0.0, %v1115
        %v1117 = vpop.f32.mrf.mxu0
        %v1118 = vadd.f32 0.0, %v1117
        %1119 = vmatprep.mubr.f32.mxu0 %v816
        %1120 = vmatmul.mubr.f32.gmra.mxu0 %v815
        %v1121 = vpop.f32.mrf.mxu0
        %v1122 = vadd.f32 0.0, %v1121
        %v1123 = vpop.f32.mrf.mxu0
        %v1124 = vadd.f32 0.0, %v1123
        %1125 = vmatprep.mubr.f32.mxu0 %v818
        %1126 = vmatmul.mubr.f32.gmra.mxu0 %v817
        %v1127 = vpop.f32.mrf.mxu0
        %v1128 = vadd.f32 0.0, %v1127
        %v1129 = vpop.f32.mrf.mxu0
        %v1130 = vadd.f32 0.0, %v1129
        %1131 = vmatprep.mubr.f32.mxu0 %v820
        %1132 = vmatmul.mubr.f32.gmra.mxu0 %v819
        %v1133 = vpop.f32.mrf.mxu0
        %v1134 = vadd.f32 0.0, %v1133
        %v1135 = vpop.f32.mrf.mxu0
        %v1136 = vadd.f32 0.0, %v1135
        %1137 = vmatprep.mubr.f32.mxu0 %v822
        %1138 = vmatmul.mubr.f32.gmra.mxu0 %v821
        %v1139 = vpop.f32.mrf.mxu0
        %v1140 = vadd.f32 0.0, %v1139
        %v1141 = vpop.f32.mrf.mxu0
        %v1142 = vadd.f32 0.0, %v1141
        %1143 = vmatprep.mubr.f32.mxu0 %v824
        %1144 = vmatmul.mubr.f32.gmra.mxu0 %v823
        %v1145 = vpop.f32.mrf.mxu0
        %v1146 = vadd.f32 0.0, %v1145
        %v1147 = vpop.f32.mrf.mxu0
        %v1148 = vadd.f32 0.0, %v1147
        %1149 = vmatprep.mubr.f32.mxu0 %v826
        %1150 = vmatmul.mubr.f32.gmra.mxu0 %v825
        %v1151 = vpop.f32.mrf.mxu0
        %v1152 = vadd.f32 0.0, %v1151
        %v1153 = vpop.f32.mrf.mxu0
        %v1154 = vadd.f32 0.0, %v1153
        %1155 = vmatprep.mubr.f32.mxu0 %v828
        %1156 = vmatmul.mubr.f32.gmra.mxu0 %v827
        %v1157 = vpop.f32.mrf.mxu0
        %v1158 = vadd.f32 0.0, %v1157
        %v1159 = vpop.f32.mrf.mxu0
        %v1160 = vadd.f32 0.0, %v1159
        %1161 = vmatprep.mubr.f32.mxu0 %v830
        %1162 = vmatmul.mubr.f32.gmra.mxu0 %v829
        %v1163 = vpop.f32.mrf.mxu0
        %v1164 = vadd.f32 0.0, %v1163
        %v1165 = vpop.f32.mrf.mxu0
        %v1166 = vadd.f32 0.0, %v1165
        %1167 = vmatprep.mubr.f32.mxu0 %v832
        %1168 = vmatmul.mubr.f32.gmra.mxu0 %v831
        %v1169 = vpop.f32.mrf.mxu0
        %v1170 = vadd.f32 0.0, %v1169
        %v1171 = vpop.f32.mrf.mxu0
        %v1172 = vadd.f32 0.0, %v1171
        %1173 = vmatprep.mubr.f32.mxu0 %v834
        %1174 = vmatmul.mubr.f32.gmra.mxu0 %v833
        %v1175 = vpop.f32.mrf.mxu0
        %v1176 = vadd.f32 0.0, %v1175
        %v1177 = vpop.f32.mrf.mxu0
        %v1178 = vadd.f32 0.0, %v1177
        %1179 = vmatprep.mubr.f32.mxu0 %v836
        %1180 = vmatmul.mubr.f32.gmra.mxu0 %v835
        %v1181 = vpop.f32.mrf.mxu0
        %v1182 = vadd.f32 0.0, %v1181
        %v1183 = vpop.f32.mrf.mxu0
        %v1184 = vadd.f32 0.0, %v1183
        %1185 = vmatprep.mubr.f32.mxu0 %v838
        %1186 = vmatmul.mubr.f32.gmra.mxu0 %v837
        %v1187 = vpop.f32.mrf.mxu0
        %v1188 = vadd.f32 0.0, %v1187
        %v1189 = vpop.f32.mrf.mxu0
        %v1190 = vadd.f32 0.0, %v1189
        %1191 = vdwg.mxu0
        %1192 = vmatprep.subr.mxu0 %v932
        %1193 = vmatpush1.msra.mxu0 %v931
        %1194 = vmatprep.subr.mxu0 %v926
        %1195 = vmatpush1.msra.mxu0 %v925
        %1196 = vmatprep.subr.mxu0 %v920
        %1197 = vmatpush1.msra.mxu0 %v919
        %1198 = vmatprep.subr.mxu0 %v914
        %1199 = vmatpush1.msra.mxu0 %v913
        %1200 = vmatprep.subr.mxu0 %v908
        %1201 = vmatpush1.msra.mxu0 %v907
        %1202 = vmatprep.subr.mxu0 %v902
        %1203 = vmatpush1.msra.mxu0 %v901
        %1204 = vmatprep.subr.mxu0 %v896
        %1205 = vmatpush1.msra.mxu0 %v895
        %1206 = vmatprep.subr.mxu0 %v890
        %1207 = vmatpush1.msra.mxu0 %v889
        %1208 = vmatprep.subr.mxu0 %v884
        %1209 = vmatpush1.msra.mxu0 %v883
        %1210 = vmatprep.subr.mxu0 %v878
        %1211 = vmatpush1.msra.mxu0 %v877
        %1212 = vmatprep.subr.mxu0 %v872
        %1213 = vmatpush1.msra.mxu0 %v871
        %1214 = vmatprep.subr.mxu0 %v866
        %1215 = vmatpush1.msra.mxu0 %v865
        %1216 = vmatprep.subr.mxu0 %v860
        %1217 = vmatpush1.msra.mxu0 %v859
        %1218 = vmatprep.subr.mxu0 %v854
        %1219 = vmatpush1.msra.mxu0 %v853
        %1220 = vmatprep.subr.mxu0 %v848
        %1221 = vmatpush1.msra.mxu0 %v847
        %1222 = vmatprep.subr.mxu0 %v842
        %1223 = vmatpush1.msra.mxu0 %v841
        %1224 = vmatprep.subr.mxu0 %v1028
        %1225 = vmatpush2.msra.mxu0 %v1027
        %1226 = vmatprep.subr.mxu0 %v1022
        %1227 = vmatpush2.msra.mxu0 %v1021
        %1228 = vmatprep.subr.mxu0 %v1016
        %1229 = vmatpush2.msra.mxu0 %v1015
        %1230 = vmatprep.subr.mxu0 %v1010
        %1231 = vmatpush2.msra.mxu0 %v1009
        %1232 = vmatprep.subr.mxu0 %v1004
        %1233 = vmatpush2.msra.mxu0 %v1003
        %1234 = vmatprep.subr.mxu0 %v998
        %1235 = vmatpush2.msra.mxu0 %v997
        %1236 = vmatprep.subr.mxu0 %v992
        %1237 = vmatpush2.msra.mxu0 %v991
        %1238 = vmatprep.subr.mxu0 %v986
        %1239 = vmatpush2.msra.mxu0 %v985
        %1240 = vmatprep.subr.mxu0 %v980
        %1241 = vmatpush2.msra.mxu0 %v979
        %1242 = vmatprep.subr.mxu0 %v974
        %1243 = vmatpush2.msra.mxu0 %v973
        %1244 = vmatprep.subr.mxu0 %v968
        %1245 = vmatpush2.msra.mxu0 %v967
        %1246 = vmatprep.subr.mxu0 %v962
        %1247 = vmatpush2.msra.mxu0 %v961
        %1248 = vmatprep.subr.mxu0 %v956
        %1249 = vmatpush2.msra.mxu0 %v955
        %1250 = vmatprep.subr.mxu0 %v950
        %1251 = vmatpush2.msra.mxu0 %v949
        %1252 = vmatprep.subr.mxu0 %v944
        %1253 = vmatpush2.msra.mxu0 %v943
        %1254 = vmatprep.subr.mxu0 %v938
        %1255 = vmatpush2.msra.mxu0 %v937
        %1256 = vmatprep.mubr.f32.mxu0 %v808
        %1257 = vmatmul.mubr.f32.gmra.mxu0 %v807
        %v1258 = vpop.f32.mrf.mxu0
        %v1259 = vadd.f32 0.0, %v1258
        %v1260 = vpop.f32.mrf.mxu0
        %v1261 = vadd.f32 0.0, %v1260
        %1262 = vmatprep.mubr.f32.mxu0 %v810
        %1263 = vmatmul.mubr.f32.gmra.mxu0 %v809
        %v1264 = vpop.f32.mrf.mxu0
        %v1265 = vadd.f32 0.0, %v1264
        %v1266 = vpop.f32.mrf.mxu0
        %v1267 = vadd.f32 0.0, %v1266
        %1268 = vmatprep.mubr.f32.mxu0 %v812
        %1269 = vmatmul.mubr.f32.gmra.mxu0 %v811
        %v1270 = vpop.f32.mrf.mxu0
        %v1271 = vadd.f32 0.0, %v1270
        %v1272 = vpop.f32.mrf.mxu0
        %v1273 = vadd.f32 0.0, %v1272
        %1274 = vmatprep.mubr.f32.mxu0 %v814
        %1275 = vmatmul.mubr.f32.gmra.mxu0 %v813
        %v1276 = vpop.f32.mrf.mxu0
        %v1277 = vadd.f32 0.0, %v1276
        %v1278 = vpop.f32.mrf.mxu0
        %v1279 = vadd.f32 0.0, %v1278
        %1280 = vmatprep.mubr.f32.mxu0 %v816
        %1281 = vmatmul.mubr.f32.gmra.mxu0 %v815
        %v1282 = vpop.f32.mrf.mxu0
        %v1283 = vadd.f32 0.0, %v1282
        %v1284 = vpop.f32.mrf.mxu0
        %v1285 = vadd.f32 0.0, %v1284
        %1286 = vmatprep.mubr.f32.mxu0 %v818
        %1287 = vmatmul.mubr.f32.gmra.mxu0 %v817
        %v1288 = vpop.f32.mrf.mxu0
        %v1289 = vadd.f32 0.0, %v1288
        %v1290 = vpop.f32.mrf.mxu0
        %v1291 = vadd.f32 0.0, %v1290
        %1292 = vmatprep.mubr.f32.mxu0 %v820
        %1293 = vmatmul.mubr.f32.gmra.mxu0 %v819
        %v1294 = vpop.f32.mrf.mxu0
        %v1295 = vadd.f32 0.0, %v1294
        %v1296 = vpop.f32.mrf.mxu0
        %v1297 = vadd.f32 0.0, %v1296
        %1298 = vmatprep.mubr.f32.mxu0 %v822
        %1299 = vmatmul.mubr.f32.gmra.mxu0 %v821
        %v1300 = vpop.f32.mrf.mxu0
        %v1301 = vadd.f32 0.0, %v1300
        %v1302 = vpop.f32.mrf.mxu0
        %v1303 = vadd.f32 0.0, %v1302
        %1304 = vmatprep.mubr.f32.mxu0 %v824
        %1305 = vmatmul.mubr.f32.gmra.mxu0 %v823
        %v1306 = vpop.f32.mrf.mxu0
        %v1307 = vadd.f32 0.0, %v1306
        %v1308 = vpop.f32.mrf.mxu0
        %v1309 = vadd.f32 0.0, %v1308
        %1310 = vmatprep.mubr.f32.mxu0 %v826
        %1311 = vmatmul.mubr.f32.gmra.mxu0 %v825
        %v1312 = vpop.f32.mrf.mxu0
        %v1313 = vadd.f32 0.0, %v1312
        %v1314 = vpop.f32.mrf.mxu0
        %v1315 = vadd.f32 0.0, %v1314
        %1316 = vmatprep.mubr.f32.mxu0 %v828
        %1317 = vmatmul.mubr.f32.gmra.mxu0 %v827
        %v1318 = vpop.f32.mrf.mxu0
        %v1319 = vadd.f32 0.0, %v1318
        %v1320 = vpop.f32.mrf.mxu0
        %v1321 = vadd.f32 0.0, %v1320
        %1322 = vmatprep.mubr.f32.mxu0 %v830
        %1323 = vmatmul.mubr.f32.gmra.mxu0 %v829
        %v1324 = vpop.f32.mrf.mxu0
        %v1325 = vadd.f32 0.0, %v1324
        %v1326 = vpop.f32.mrf.mxu0
        %v1327 = vadd.f32 0.0, %v1326
        %1328 = vmatprep.mubr.f32.mxu0 %v832
        %1329 = vmatmul.mubr.f32.gmra.mxu0 %v831
        %v1330 = vpop.f32.mrf.mxu0
        %v1331 = vadd.f32 0.0, %v1330
        %v1332 = vpop.f32.mrf.mxu0
        %v1333 = vadd.f32 0.0, %v1332
        %1334 = vmatprep.mubr.f32.mxu0 %v834
        %1335 = vmatmul.mubr.f32.gmra.mxu0 %v833
        %v1336 = vpop.f32.mrf.mxu0
        %v1337 = vadd.f32 0.0, %v1336
        %v1338 = vpop.f32.mrf.mxu0
        %v1339 = vadd.f32 0.0, %v1338
        %1340 = vmatprep.mubr.f32.mxu0 %v836
        %1341 = vmatmul.mubr.f32.gmra.mxu0 %v835
        %v1342 = vpop.f32.mrf.mxu0
        %v1343 = vadd.f32 0.0, %v1342
        %v1344 = vpop.f32.mrf.mxu0
        %v1345 = vadd.f32 0.0, %v1344
        %1346 = vmatprep.mubr.f32.mxu0 %v838
        %1347 = vmatmul.mubr.f32.gmra.mxu0 %v837
        %v1348 = vpop.f32.mrf.mxu0
        %v1349 = vadd.f32 0.0, %v1348
        %v1350 = vpop.f32.mrf.mxu0
        %v1351 = vadd.f32 0.0, %v1350
        %1352 = vdwg.mxu0
        %1353 = vmatprep.subr.mxu0 %v934
        %1354 = vmatpush1.msra.mxu0 %v933
        %1355 = vmatprep.subr.mxu0 %v928
        %1356 = vmatpush1.msra.mxu0 %v927
        %1357 = vmatprep.subr.mxu0 %v922
        %1358 = vmatpush1.msra.mxu0 %v921
        %1359 = vmatprep.subr.mxu0 %v916
        %1360 = vmatpush1.msra.mxu0 %v915
        %1361 = vmatprep.subr.mxu0 %v910
        %1362 = vmatpush1.msra.mxu0 %v909
        %1363 = vmatprep.subr.mxu0 %v904
        %1364 = vmatpush1.msra.mxu0 %v903
        %1365 = vmatprep.subr.mxu0 %v898
        %1366 = vmatpush1.msra.mxu0 %v897
        %1367 = vmatprep.subr.mxu0 %v892
        %1368 = vmatpush1.msra.mxu0 %v891
        %1369 = vmatprep.subr.mxu0 %v886
        %1370 = vmatpush1.msra.mxu0 %v885
        %1371 = vmatprep.subr.mxu0 %v880
        %1372 = vmatpush1.msra.mxu0 %v879
        %1373 = vmatprep.subr.mxu0 %v874
        %1374 = vmatpush1.msra.mxu0 %v873
        %1375 = vmatprep.subr.mxu0 %v868
        %1376 = vmatpush1.msra.mxu0 %v867
        %1377 = vmatprep.subr.mxu0 %v862
        %1378 = vmatpush1.msra.mxu0 %v861
        %1379 = vmatprep.subr.mxu0 %v856
        %1380 = vmatpush1.msra.mxu0 %v855
        %1381 = vmatprep.subr.mxu0 %v850
        %1382 = vmatpush1.msra.mxu0 %v849
        %1383 = vmatprep.subr.mxu0 %v844
        %1384 = vmatpush1.msra.mxu0 %v843
        %1385 = vmatprep.subr.mxu0 %v1030
        %1386 = vmatpush2.msra.mxu0 %v1029
        %1387 = vmatprep.subr.mxu0 %v1024
        %1388 = vmatpush2.msra.mxu0 %v1023
        %1389 = vmatprep.subr.mxu0 %v1018
        %1390 = vmatpush2.msra.mxu0 %v1017
        %1391 = vmatprep.subr.mxu0 %v1012
        %1392 = vmatpush2.msra.mxu0 %v1011
        %1393 = vmatprep.subr.mxu0 %v1006
        %1394 = vmatpush2.msra.mxu0 %v1005
        %1395 = vmatprep.subr.mxu0 %v1000
        %1396 = vmatpush2.msra.mxu0 %v999
        %1397 = vmatprep.subr.mxu0 %v994
        %1398 = vmatpush2.msra.mxu0 %v993
        %1399 = vmatprep.subr.mxu0 %v988
        %1400 = vmatpush2.msra.mxu0 %v987
        %1401 = vmatprep.subr.mxu0 %v982
        %1402 = vmatpush2.msra.mxu0 %v981
        %1403 = vmatprep.subr.mxu0 %v976
        %1404 = vmatpush2.msra.mxu0 %v975
        %1405 = vmatprep.subr.mxu0 %v970
        %1406 = vmatpush2.msra.mxu0 %v969
        %1407 = vmatprep.subr.mxu0 %v964
        %1408 = vmatpush2.msra.mxu0 %v963
        %1409 = vmatprep.subr.mxu0 %v958
        %1410 = vmatpush2.msra.mxu0 %v957
        %1411 = vmatprep.subr.mxu0 %v952
        %1412 = vmatpush2.msra.mxu0 %v951
        %1413 = vmatprep.subr.mxu0 %v946
        %1414 = vmatpush2.msra.mxu0 %v945
        %1415 = vmatprep.subr.mxu0 %v940
        %1416 = vmatpush2.msra.mxu0 %v939
        %1417 = vmatprep.mubr.f32.mxu0 %v808
        %1418 = vmatmul.mubr.f32.gmra.mxu0 %v807
        %v1419 = vpop.f32.mrf.mxu0
        %v1420 = vadd.f32 0.0, %v1419
        %v1421 = vpop.f32.mrf.mxu0
        %v1422 = vadd.f32 0.0, %v1421
        %1423 = vmatprep.mubr.f32.mxu0 %v810
        %1424 = vmatmul.mubr.f32.gmra.mxu0 %v809
        %v1425 = vpop.f32.mrf.mxu0
        %v1426 = vadd.f32 0.0, %v1425
        %v1427 = vpop.f32.mrf.mxu0
        %v1428 = vadd.f32 0.0, %v1427
        %1429 = vmatprep.mubr.f32.mxu0 %v812
        %1430 = vmatmul.mubr.f32.gmra.mxu0 %v811
        %v1431 = vpop.f32.mrf.mxu0
        %v1432 = vadd.f32 0.0, %v1431
        %v1433 = vpop.f32.mrf.mxu0
        %v1434 = vadd.f32 0.0, %v1433
        %1435 = vmatprep.mubr.f32.mxu0 %v814
        %1436 = vmatmul.mubr.f32.gmra.mxu0 %v813
        %v1437 = vpop.f32.mrf.mxu0
        %v1438 = vadd.f32 0.0, %v1437
        %v1439 = vpop.f32.mrf.mxu0
        %v1440 = vadd.f32 0.0, %v1439
        %1441 = vmatprep.mubr.f32.mxu0 %v816
        %1442 = vmatmul.mubr.f32.gmra.mxu0 %v815
        %v1443 = vpop.f32.mrf.mxu0
        %v1444 = vadd.f32 0.0, %v1443
        %v1445 = vpop.f32.mrf.mxu0
        %v1446 = vadd.f32 0.0, %v1445
        %1447 = vmatprep.mubr.f32.mxu0 %v818
        %1448 = vmatmul.mubr.f32.gmra.mxu0 %v817
        %v1449 = vpop.f32.mrf.mxu0
        %v1450 = vadd.f32 0.0, %v1449
        %v1451 = vpop.f32.mrf.mxu0
        %v1452 = vadd.f32 0.0, %v1451
        %1453 = vmatprep.mubr.f32.mxu0 %v820
        %1454 = vmatmul.mubr.f32.gmra.mxu0 %v819
        %v1455 = vpop.f32.mrf.mxu0
        %v1456 = vadd.f32 0.0, %v1455
        %v1457 = vpop.f32.mrf.mxu0
        %v1458 = vadd.f32 0.0, %v1457
        %1459 = vmatprep.mubr.f32.mxu0 %v822
        %1460 = vmatmul.mubr.f32.gmra.mxu0 %v821
        %v1461 = vpop.f32.mrf.mxu0
        %v1462 = vadd.f32 0.0, %v1461
        %v1463 = vpop.f32.mrf.mxu0
        %v1464 = vadd.f32 0.0, %v1463
        %1465 = vmatprep.mubr.f32.mxu0 %v824
        %1466 = vmatmul.mubr.f32.gmra.mxu0 %v823
        %v1467 = vpop.f32.mrf.mxu0
        %v1468 = vadd.f32 0.0, %v1467
        %v1469 = vpop.f32.mrf.mxu0
        %v1470 = vadd.f32 0.0, %v1469
        %1471 = vmatprep.mubr.f32.mxu0 %v826
        %1472 = vmatmul.mubr.f32.gmra.mxu0 %v825
        %v1473 = vpop.f32.mrf.mxu0
        %v1474 = vadd.f32 0.0, %v1473
        %v1475 = vpop.f32.mrf.mxu0
        %v1476 = vadd.f32 0.0, %v1475
        %1477 = vmatprep.mubr.f32.mxu0 %v828
        %1478 = vmatmul.mubr.f32.gmra.mxu0 %v827
        %v1479 = vpop.f32.mrf.mxu0
        %v1480 = vadd.f32 0.0, %v1479
        %v1481 = vpop.f32.mrf.mxu0
        %v1482 = vadd.f32 0.0, %v1481
        %1483 = vmatprep.mubr.f32.mxu0 %v830
        %1484 = vmatmul.mubr.f32.gmra.mxu0 %v829
        %v1485 = vpop.f32.mrf.mxu0
        %v1486 = vadd.f32 0.0, %v1485
        %v1487 = vpop.f32.mrf.mxu0
        %v1488 = vadd.f32 0.0, %v1487
        %1489 = vmatprep.mubr.f32.mxu0 %v832
        %1490 = vmatmul.mubr.f32.gmra.mxu0 %v831
        %v1491 = vpop.f32.mrf.mxu0
        %v1492 = vadd.f32 0.0, %v1491
        %v1493 = vpop.f32.mrf.mxu0
        %v1494 = vadd.f32 0.0, %v1493
        %1495 = vmatprep.mubr.f32.mxu0 %v834
        %1496 = vmatmul.mubr.f32.gmra.mxu0 %v833
        %v1497 = vpop.f32.mrf.mxu0
        %v1498 = vadd.f32 0.0, %v1497
        %v1499 = vpop.f32.mrf.mxu0
        %v1500 = vadd.f32 0.0, %v1499
        %1501 = vmatprep.mubr.f32.mxu0 %v836
        %1502 = vmatmul.mubr.f32.gmra.mxu0 %v835
        %v1503 = vpop.f32.mrf.mxu0
        %v1504 = vadd.f32 0.0, %v1503
        %v1505 = vpop.f32.mrf.mxu0
        %v1506 = vadd.f32 0.0, %v1505
        %1507 = vmatprep.mubr.f32.mxu0 %v838
        %1508 = vmatmul.mubr.f32.gmra.mxu0 %v837
        %v1509 = vpop.f32.mrf.mxu0
        %v1510 = vadd.f32 0.0, %v1509
        %v1511 = vpop.f32.mrf.mxu0
        %v1512 = vadd.f32 0.0, %v1511
        %1513 = vdwg.mxu0
        %v1514 = vmul.f32 %v1098, 0.088388346
        %v1515 = vmul.f32 %v1100, 0.088388346
        %v1516 = vmul.f32 %v1104, 0.088388346
        %v1517 = vmul.f32 %v1106, 0.088388346
        %v1518 = vmul.f32 %v1110, 0.088388346
        %v1519 = vmul.f32 %v1112, 0.088388346
        %v1520 = vmul.f32 %v1116, 0.088388346
        %v1521 = vmul.f32 %v1118, 0.088388346
        %v1522 = vmul.f32 %v1122, 0.088388346
        %v1523 = vmul.f32 %v1124, 0.088388346
        %v1524 = vmul.f32 %v1128, 0.088388346
        %v1525 = vmul.f32 %v1130, 0.088388346
        %v1526 = vmul.f32 %v1134, 0.088388346
        %v1527 = vmul.f32 %v1136, 0.088388346
        %v1528 = vmul.f32 %v1140, 0.088388346
        %v1529 = vmul.f32 %v1142, 0.088388346
        %v1530 = vmul.f32 %v1146, 0.088388346
        %v1531 = vmul.f32 %v1148, 0.088388346
        %v1532 = vmul.f32 %v1152, 0.088388346
        %v1533 = vmul.f32 %v1154, 0.088388346
        %v1534 = vmul.f32 %v1158, 0.088388346
        %v1535 = vmul.f32 %v1160, 0.088388346
        %v1536 = vmul.f32 %v1164, 0.088388346
        %v1537 = vmul.f32 %v1166, 0.088388346
        %v1538 = vmul.f32 %v1170, 0.088388346
        %v1539 = vmul.f32 %v1172, 0.088388346
        %v1540 = vmul.f32 %v1176, 0.088388346
        %v1541 = vmul.f32 %v1178, 0.088388346
        %v1542 = vmul.f32 %v1182, 0.088388346
        %v1543 = vmul.f32 %v1184, 0.088388346
        %v1544 = vmul.f32 %v1188, 0.088388346
        %v1545 = vmul.f32 %v1190, 0.088388346
        %v1546 = vld [vmem:[%s391] sm:$0xff]
        %v1547 = vld [vmem:[%s391 + $0x8] sm:$0xff]
        %v1548 = vld [vmem:[%s391 + $0x10] sm:$0xff]
        %v1549 = vld [vmem:[%s391 + $0x18] sm:$0xff]
        %v1550 = vld [vmem:[%s391 + $0x20] sm:$0xff]
        %v1551 = vld [vmem:[%s391 + $0x28] sm:$0xff]
        %v1552 = vld [vmem:[%s391 + $0x30] sm:$0xff]
        %v1553 = vld [vmem:[%s391 + $0x38] sm:$0xff]
        %v1554 = vld [vmem:[%s391 + $0x40] sm:$0xff]
        %v1555 = vld [vmem:[%s391 + $0x48] sm:$0xff]
        %v1556 = vld [vmem:[%s391 + $0x50] sm:$0xff]
        %v1557 = vld [vmem:[%s391 + $0x58] sm:$0xff]
        %v1558 = vld [vmem:[%s391 + $0x60] sm:$0xff]
        %v1559 = vld [vmem:[%s391 + $0x68] sm:$0xff]
        %v1560 = vld [vmem:[%s391 + $0x70] sm:$0xff]
        %v1561 = vld [vmem:[%s391 + $0x78] sm:$0xff]
        %v1562 = vld [vmem:[%s400] sm:$0xff]
        %v1563 = vld [vmem:[%s400 + $0x8] sm:$0xff]
        %v1564 = vld [vmem:[%s400 + $0x10] sm:$0xff]
        %v1565 = vld [vmem:[%s400 + $0x18] sm:$0xff]
        %v1566 = vld [vmem:[%s400 + $0x20] sm:$0xff]
        %v1567 = vld [vmem:[%s400 + $0x28] sm:$0xff]
        %v1568 = vld [vmem:[%s400 + $0x30] sm:$0xff]
        %v1569 = vld [vmem:[%s400 + $0x38] sm:$0xff]
        %v1570 = vld [vmem:[%s400 + $0x40] sm:$0xff]
        %v1571 = vld [vmem:[%s400 + $0x48] sm:$0xff]
        %v1572 = vld [vmem:[%s400 + $0x50] sm:$0xff]
        %v1573 = vld [vmem:[%s400 + $0x58] sm:$0xff]
        %v1574 = vld [vmem:[%s400 + $0x60] sm:$0xff]
        %v1575 = vld [vmem:[%s400 + $0x68] sm:$0xff]
        %v1576 = vld [vmem:[%s400 + $0x70] sm:$0xff]
        %v1577 = vld [vmem:[%s400 + $0x78] sm:$0xff]
        %v1578 = vmul.f32 %v1514, %v1546
        %v1579 = vmul.f32 %v1516, %v1547
        %v1580 = vmul.f32 %v1518, %v1548
        %v1581 = vmul.f32 %v1520, %v1549
        %v1582 = vmul.f32 %v1522, %v1550
        %v1583 = vmul.f32 %v1524, %v1551
        %v1584 = vmul.f32 %v1526, %v1552
        %v1585 = vmul.f32 %v1528, %v1553
        %v1586 = vmul.f32 %v1530, %v1554
        %v1587 = vmul.f32 %v1532, %v1555
        %v1588 = vmul.f32 %v1534, %v1556
        %v1589 = vmul.f32 %v1536, %v1557
        %v1590 = vmul.f32 %v1538, %v1558
        %v1591 = vmul.f32 %v1540, %v1559
        %v1592 = vmul.f32 %v1542, %v1560
        %v1593 = vmul.f32 %v1544, %v1561
        %1610 = vrot.lane.b32.xlu0 %v1562, 64
        %v1611 = vpop.permute.xlu0 %1610
        %1612 = vrot.lane.b32.xlu0 %v1563, 64
        %v1613 = vpop.permute.xlu0 %1612
        %1614 = vrot.lane.b32.xlu0 %v1564, 64
        %v1615 = vpop.permute.xlu0 %1614
        %1616 = vrot.lane.b32.xlu0 %v1565, 64
        %v1617 = vpop.permute.xlu0 %1616
        %1618 = vrot.lane.b32.xlu0 %v1566, 64
        %v1619 = vpop.permute.xlu0 %1618
        %1620 = vrot.lane.b32.xlu0 %v1567, 64
        %v1621 = vpop.permute.xlu0 %1620
        %1622 = vrot.lane.b32.xlu0 %v1568, 64
        %v1623 = vpop.permute.xlu0 %1622
        %1624 = vrot.lane.b32.xlu0 %v1569, 64
        %v1625 = vpop.permute.xlu0 %1624
        %1626 = vrot.lane.b32.xlu0 %v1570, 64
        %v1627 = vpop.permute.xlu0 %1626
        %1628 = vrot.lane.b32.xlu0 %v1571, 64
        %v1629 = vpop.permute.xlu0 %1628
        %1630 = vrot.lane.b32.xlu0 %v1572, 64
        %v1631 = vpop.permute.xlu0 %1630
        %1632 = vrot.lane.b32.xlu0 %v1573, 64
        %v1633 = vpop.permute.xlu0 %1632
        %1634 = vrot.lane.b32.xlu0 %v1574, 64
        %v1635 = vpop.permute.xlu0 %1634
        %1636 = vrot.lane.b32.xlu0 %v1575, 64
        %v1637 = vpop.permute.xlu0 %1636
        %1638 = vrot.lane.b32.xlu0 %v1576, 64
        %v1639 = vpop.permute.xlu0 %1638
        %1640 = vrot.lane.b32.xlu0 %v1577, 64
        %v1641 = vpop.permute.xlu0 %1640
        %v1658 = vmul.f32 %v1514, %v1611
        %v1659 = vmul.f32 %v1516, %v1613
        %v1660 = vmul.f32 %v1518, %v1615
        %v1661 = vmul.f32 %v1520, %v1617
        %v1662 = vmul.f32 %v1522, %v1619
        %v1663 = vmul.f32 %v1524, %v1621
        %v1664 = vmul.f32 %v1526, %v1623
        %v1665 = vmul.f32 %v1528, %v1625
        %v1666 = vmul.f32 %v1530, %v1627
        %v1667 = vmul.f32 %v1532, %v1629
        %v1668 = vmul.f32 %v1534, %v1631
        %v1669 = vmul.f32 %v1536, %v1633
        %v1670 = vmul.f32 %v1538, %v1635
        %v1671 = vmul.f32 %v1540, %v1637
        %v1672 = vmul.f32 %v1542, %v1639
        %v1673 = vmul.f32 %v1544, %v1641
        %1690 = vrot.lane.b32.xlu0 %v1658, 64
        %v1691 = vpop.permute.xlu0 %1690
        %1692 = vrot.lane.b32.xlu0 %v1659, 64
        %v1693 = vpop.permute.xlu0 %1692
        %1694 = vrot.lane.b32.xlu0 %v1660, 64
        %v1695 = vpop.permute.xlu0 %1694
        %1696 = vrot.lane.b32.xlu0 %v1661, 64
        %v1697 = vpop.permute.xlu0 %1696
        %1698 = vrot.lane.b32.xlu0 %v1662, 64
        %v1699 = vpop.permute.xlu0 %1698
        %1700 = vrot.lane.b32.xlu0 %v1663, 64
        %v1701 = vpop.permute.xlu0 %1700
        %1702 = vrot.lane.b32.xlu0 %v1664, 64
        %v1703 = vpop.permute.xlu0 %1702
        %1704 = vrot.lane.b32.xlu0 %v1665, 64
        %v1705 = vpop.permute.xlu0 %1704
        %1706 = vrot.lane.b32.xlu0 %v1666, 64
        %v1707 = vpop.permute.xlu0 %1706
        %1708 = vrot.lane.b32.xlu0 %v1667, 64
        %v1709 = vpop.permute.xlu0 %1708
        %1710 = vrot.lane.b32.xlu0 %v1668, 64
        %v1711 = vpop.permute.xlu0 %1710
        %1712 = vrot.lane.b32.xlu0 %v1669, 64
        %v1713 = vpop.permute.xlu0 %1712
        %1714 = vrot.lane.b32.xlu0 %v1670, 64
        %v1715 = vpop.permute.xlu0 %1714
        %1716 = vrot.lane.b32.xlu0 %v1671, 64
        %v1717 = vpop.permute.xlu0 %1716
        %1718 = vrot.lane.b32.xlu0 %v1672, 64
        %v1719 = vpop.permute.xlu0 %1718
        %1720 = vrot.lane.b32.xlu0 %v1673, 64
        %v1721 = vpop.permute.xlu0 %1720
        %v1738 = vsub.f32 %v1578, %v1691
        %v1739 = vsub.f32 %v1579, %v1693
        %v1740 = vsub.f32 %v1580, %v1695
        %v1741 = vsub.f32 %v1581, %v1697
        %v1742 = vsub.f32 %v1582, %v1699
        %v1743 = vsub.f32 %v1583, %v1701
        %v1744 = vsub.f32 %v1584, %v1703
        %v1745 = vsub.f32 %v1585, %v1705
        %v1746 = vsub.f32 %v1586, %v1707
        %v1747 = vsub.f32 %v1587, %v1709
        %v1748 = vsub.f32 %v1588, %v1711
        %v1749 = vsub.f32 %v1589, %v1713
        %v1750 = vsub.f32 %v1590, %v1715
        %v1751 = vsub.f32 %v1591, %v1717
        %v1752 = vsub.f32 %v1592, %v1719
        %v1753 = vsub.f32 %v1593, %v1721
        %vm1754 = vcmask 523264
        %1755 = vst.msk [vmem:[%s442] sm:$0xff] %vm1754, %v1738
        %1756 = vst.msk [vmem:[%s442 + $0x10] sm:$0xff] %vm1754, %v1739
        %1757 = vst.msk [vmem:[%s442 + $0x20] sm:$0xff] %vm1754, %v1740
        %1758 = vst.msk [vmem:[%s442 + $0x30] sm:$0xff] %vm1754, %v1741
        %1759 = vst.msk [vmem:[%s442 + $0x40] sm:$0xff] %vm1754, %v1742
        %1760 = vst.msk [vmem:[%s442 + $0x50] sm:$0xff] %vm1754, %v1743
        %1761 = vst.msk [vmem:[%s442 + $0x60] sm:$0xff] %vm1754, %v1744
        %1762 = vst.msk [vmem:[%s442 + $0x70] sm:$0xff] %vm1754, %v1745
        %1763 = vst.msk [vmem:[%s442 + $0x80] sm:$0xff] %vm1754, %v1746
        %1764 = vst.msk [vmem:[%s442 + $0x90] sm:$0xff] %vm1754, %v1747
        %1765 = vst.msk [vmem:[%s442 + $0xa0] sm:$0xff] %vm1754, %v1748
        %1766 = vst.msk [vmem:[%s442 + $0xb0] sm:$0xff] %vm1754, %v1749
        %1767 = vst.msk [vmem:[%s442 + $0xc0] sm:$0xff] %vm1754, %v1750
        %1768 = vst.msk [vmem:[%s442 + $0xd0] sm:$0xff] %vm1754, %v1751
        %1769 = vst.msk [vmem:[%s442 + $0xe0] sm:$0xff] %vm1754, %v1752
        %1770 = vst.msk [vmem:[%s442 + $0xf0] sm:$0xff] %vm1754, %v1753
        %v1771 = vadd.f32 %v1578, %v1691
        %v1772 = vadd.f32 %v1579, %v1693
        %v1773 = vadd.f32 %v1580, %v1695
        %v1774 = vadd.f32 %v1581, %v1697
        %v1775 = vadd.f32 %v1582, %v1699
        %v1776 = vadd.f32 %v1583, %v1701
        %v1777 = vadd.f32 %v1584, %v1703
        %v1778 = vadd.f32 %v1585, %v1705
        %v1779 = vadd.f32 %v1586, %v1707
        %v1780 = vadd.f32 %v1587, %v1709
        %v1781 = vadd.f32 %v1588, %v1711
        %v1782 = vadd.f32 %v1589, %v1713
        %v1783 = vadd.f32 %v1590, %v1715
        %v1784 = vadd.f32 %v1591, %v1717
        %v1785 = vadd.f32 %v1592, %v1719
        %v1786 = vadd.f32 %v1593, %v1721
        %vm1787 = vcmask 1048064
        %1788 = vst.msk [vmem:[%s442] sm:$0xff] %vm1787, %v1771
        %1789 = vst.msk [vmem:[%s442 + $0x10] sm:$0xff] %vm1787, %v1772
        %1790 = vst.msk [vmem:[%s442 + $0x20] sm:$0xff] %vm1787, %v1773
        %1791 = vst.msk [vmem:[%s442 + $0x30] sm:$0xff] %vm1787, %v1774
        %1792 = vst.msk [vmem:[%s442 + $0x40] sm:$0xff] %vm1787, %v1775
        %1793 = vst.msk [vmem:[%s442 + $0x50] sm:$0xff] %vm1787, %v1776
        %1794 = vst.msk [vmem:[%s442 + $0x60] sm:$0xff] %vm1787, %v1777
        %1795 = vst.msk [vmem:[%s442 + $0x70] sm:$0xff] %vm1787, %v1778
        %1796 = vst.msk [vmem:[%s442 + $0x80] sm:$0xff] %vm1787, %v1779
        %1797 = vst.msk [vmem:[%s442 + $0x90] sm:$0xff] %vm1787, %v1780
        %1798 = vst.msk [vmem:[%s442 + $0xa0] sm:$0xff] %vm1787, %v1781
        %1799 = vst.msk [vmem:[%s442 + $0xb0] sm:$0xff] %vm1787, %v1782
        %1800 = vst.msk [vmem:[%s442 + $0xc0] sm:$0xff] %vm1787, %v1783
        %1801 = vst.msk [vmem:[%s442 + $0xd0] sm:$0xff] %vm1787, %v1784
        %1802 = vst.msk [vmem:[%s442 + $0xe0] sm:$0xff] %vm1787, %v1785
        %1803 = vst.msk [vmem:[%s442 + $0xf0] sm:$0xff] %vm1787, %v1786
        %v1804 = vmul.f32 %v1259, %v1546
        %v1805 = vmul.f32 %v1265, %v1547
        %v1806 = vmul.f32 %v1271, %v1548
        %v1807 = vmul.f32 %v1277, %v1549
        %v1808 = vmul.f32 %v1283, %v1550
        %v1809 = vmul.f32 %v1289, %v1551
        %v1810 = vmul.f32 %v1295, %v1552
        %v1811 = vmul.f32 %v1301, %v1553
        %v1812 = vmul.f32 %v1307, %v1554
        %v1813 = vmul.f32 %v1313, %v1555
        %v1814 = vmul.f32 %v1319, %v1556
        %v1815 = vmul.f32 %v1325, %v1557
        %v1816 = vmul.f32 %v1331, %v1558
        %v1817 = vmul.f32 %v1337, %v1559
        %v1818 = vmul.f32 %v1343, %v1560
        %v1819 = vmul.f32 %v1349, %v1561
        %v1820 = vmul.f32 %v1259, %v1611
        %v1821 = vmul.f32 %v1265, %v1613
        %v1822 = vmul.f32 %v1271, %v1615
        %v1823 = vmul.f32 %v1277, %v1617
        %v1824 = vmul.f32 %v1283, %v1619
        %v1825 = vmul.f32 %v1289, %v1621
        %v1826 = vmul.f32 %v1295, %v1623
        %v1827 = vmul.f32 %v1301, %v1625
        %v1828 = vmul.f32 %v1307, %v1627
        %v1829 = vmul.f32 %v1313, %v1629
        %v1830 = vmul.f32 %v1319, %v1631
        %v1831 = vmul.f32 %v1325, %v1633
        %v1832 = vmul.f32 %v1331, %v1635
        %v1833 = vmul.f32 %v1337, %v1637
        %v1834 = vmul.f32 %v1343, %v1639
        %v1835 = vmul.f32 %v1349, %v1641
        %1852 = vrot.lane.b32.xlu0 %v1820, 64
        %v1853 = vpop.permute.xlu0 %1852
        %1854 = vrot.lane.b32.xlu0 %v1821, 64
        %v1855 = vpop.permute.xlu0 %1854
        %1856 = vrot.lane.b32.xlu0 %v1822, 64
        %v1857 = vpop.permute.xlu0 %1856
        %1858 = vrot.lane.b32.xlu0 %v1823, 64
        %v1859 = vpop.permute.xlu0 %1858
        %1860 = vrot.lane.b32.xlu0 %v1824, 64
        %v1861 = vpop.permute.xlu0 %1860
        %1862 = vrot.lane.b32.xlu0 %v1825, 64
        %v1863 = vpop.permute.xlu0 %1862
        %1864 = vrot.lane.b32.xlu0 %v1826, 64
        %v1865 = vpop.permute.xlu0 %1864
        %1866 = vrot.lane.b32.xlu0 %v1827, 64
        %v1867 = vpop.permute.xlu0 %1866
        %1868 = vrot.lane.b32.xlu0 %v1828, 64
        %v1869 = vpop.permute.xlu0 %1868
        %1870 = vrot.lane.b32.xlu0 %v1829, 64
        %v1871 = vpop.permute.xlu0 %1870
        %1872 = vrot.lane.b32.xlu0 %v1830, 64
        %v1873 = vpop.permute.xlu0 %1872
        %1874 = vrot.lane.b32.xlu0 %v1831, 64
        %v1875 = vpop.permute.xlu0 %1874
        %1876 = vrot.lane.b32.xlu0 %v1832, 64
        %v1877 = vpop.permute.xlu0 %1876
        %1878 = vrot.lane.b32.xlu0 %v1833, 64
        %v1879 = vpop.permute.xlu0 %1878
        %1880 = vrot.lane.b32.xlu0 %v1834, 64
        %v1881 = vpop.permute.xlu0 %1880
        %1882 = vrot.lane.b32.xlu0 %v1835, 64
        %v1883 = vpop.permute.xlu0 %1882
        %v1900 = vsub.f32 %v1804, %v1853
        %v1901 = vsub.f32 %v1805, %v1855
        %v1902 = vsub.f32 %v1806, %v1857
        %v1903 = vsub.f32 %v1807, %v1859
        %v1904 = vsub.f32 %v1808, %v1861
        %v1905 = vsub.f32 %v1809, %v1863
        %v1906 = vsub.f32 %v1810, %v1865
        %v1907 = vsub.f32 %v1811, %v1867
        %v1908 = vsub.f32 %v1812, %v1869
        %v1909 = vsub.f32 %v1813, %v1871
        %v1910 = vsub.f32 %v1814, %v1873
        %v1911 = vsub.f32 %v1815, %v1875
        %v1912 = vsub.f32 %v1816, %v1877
        %v1913 = vsub.f32 %v1817, %v1879
        %v1914 = vsub.f32 %v1818, %v1881
        %v1915 = vsub.f32 %v1819, %v1883
        %v1916 = vadd.f32 %v1804, %v1853
        %v1917 = vadd.f32 %v1805, %v1855
        %v1918 = vadd.f32 %v1806, %v1857
        %v1919 = vadd.f32 %v1807, %v1859
        %v1920 = vadd.f32 %v1808, %v1861
        %v1921 = vadd.f32 %v1809, %v1863
        %v1922 = vadd.f32 %v1810, %v1865
        %v1923 = vadd.f32 %v1811, %v1867
        %v1924 = vadd.f32 %v1812, %v1869
        %v1925 = vadd.f32 %v1813, %v1871
        %v1926 = vadd.f32 %v1814, %v1873
        %v1927 = vadd.f32 %v1815, %v1875
        %v1928 = vadd.f32 %v1816, %v1877
        %v1929 = vadd.f32 %v1817, %v1879
        %v1930 = vadd.f32 %v1818, %v1881
        %v1931 = vadd.f32 %v1819, %v1883
        %v1932 = vmul.f32 %v1515, %v1546
        %v1933 = vmul.f32 %v1517, %v1547
        %v1934 = vmul.f32 %v1519, %v1548
        %v1935 = vmul.f32 %v1521, %v1549
        %v1936 = vmul.f32 %v1523, %v1550
        %v1937 = vmul.f32 %v1525, %v1551
        %v1938 = vmul.f32 %v1527, %v1552
        %v1939 = vmul.f32 %v1529, %v1553
        %v1940 = vmul.f32 %v1531, %v1554
        %v1941 = vmul.f32 %v1533, %v1555
        %v1942 = vmul.f32 %v1535, %v1556
        %v1943 = vmul.f32 %v1537, %v1557
        %v1944 = vmul.f32 %v1539, %v1558
        %v1945 = vmul.f32 %v1541, %v1559
        %v1946 = vmul.f32 %v1543, %v1560
        %v1947 = vmul.f32 %v1545, %v1561
        %v1948 = vmul.f32 %v1515, %v1611
        %v1949 = vmul.f32 %v1517, %v1613
        %v1950 = vmul.f32 %v1519, %v1615
        %v1951 = vmul.f32 %v1521, %v1617
        %v1952 = vmul.f32 %v1523, %v1619
        %v1953 = vmul.f32 %v1525, %v1621
        %v1954 = vmul.f32 %v1527, %v1623
        %v1955 = vmul.f32 %v1529, %v1625
        %v1956 = vmul.f32 %v1531, %v1627
        %v1957 = vmul.f32 %v1533, %v1629
        %v1958 = vmul.f32 %v1535, %v1631
        %v1959 = vmul.f32 %v1537, %v1633
        %v1960 = vmul.f32 %v1539, %v1635
        %v1961 = vmul.f32 %v1541, %v1637
        %v1962 = vmul.f32 %v1543, %v1639
        %v1963 = vmul.f32 %v1545, %v1641
        %1980 = vrot.lane.b32.xlu0 %v1948, 64
        %v1981 = vpop.permute.xlu0 %1980
        %1982 = vrot.lane.b32.xlu0 %v1949, 64
        %v1983 = vpop.permute.xlu0 %1982
        %1984 = vrot.lane.b32.xlu0 %v1950, 64
        %v1985 = vpop.permute.xlu0 %1984
        %1986 = vrot.lane.b32.xlu0 %v1951, 64
        %v1987 = vpop.permute.xlu0 %1986
        %1988 = vrot.lane.b32.xlu0 %v1952, 64
        %v1989 = vpop.permute.xlu0 %1988
        %1990 = vrot.lane.b32.xlu0 %v1953, 64
        %v1991 = vpop.permute.xlu0 %1990
        %1992 = vrot.lane.b32.xlu0 %v1954, 64
        %v1993 = vpop.permute.xlu0 %1992
        %1994 = vrot.lane.b32.xlu0 %v1955, 64
        %v1995 = vpop.permute.xlu0 %1994
        %1996 = vrot.lane.b32.xlu0 %v1956, 64
        %v1997 = vpop.permute.xlu0 %1996
        %1998 = vrot.lane.b32.xlu0 %v1957, 64
        %v1999 = vpop.permute.xlu0 %1998
        %2000 = vrot.lane.b32.xlu0 %v1958, 64
        %v2001 = vpop.permute.xlu0 %2000
        %2002 = vrot.lane.b32.xlu0 %v1959, 64
        %v2003 = vpop.permute.xlu0 %2002
        %2004 = vrot.lane.b32.xlu0 %v1960, 64
        %v2005 = vpop.permute.xlu0 %2004
        %2006 = vrot.lane.b32.xlu0 %v1961, 64
        %v2007 = vpop.permute.xlu0 %2006
        %2008 = vrot.lane.b32.xlu0 %v1962, 64
        %v2009 = vpop.permute.xlu0 %2008
        %2010 = vrot.lane.b32.xlu0 %v1963, 64
        %v2011 = vpop.permute.xlu0 %2010
        %v2028 = vsub.f32 %v1932, %v1981
        %v2029 = vsub.f32 %v1933, %v1983
        %v2030 = vsub.f32 %v1934, %v1985
        %v2031 = vsub.f32 %v1935, %v1987
        %v2032 = vsub.f32 %v1936, %v1989
        %v2033 = vsub.f32 %v1937, %v1991
        %v2034 = vsub.f32 %v1938, %v1993
        %v2035 = vsub.f32 %v1939, %v1995
        %v2036 = vsub.f32 %v1940, %v1997
        %v2037 = vsub.f32 %v1941, %v1999
        %v2038 = vsub.f32 %v1942, %v2001
        %v2039 = vsub.f32 %v1943, %v2003
        %v2040 = vsub.f32 %v1944, %v2005
        %v2041 = vsub.f32 %v1945, %v2007
        %v2042 = vsub.f32 %v1946, %v2009
        %v2043 = vsub.f32 %v1947, %v2011
        %2044 = vst.msk [vmem:[%s442 + $0x8] sm:$0xff] %vm1754, %v2028
        %2045 = vst.msk [vmem:[%s442 + $0x18] sm:$0xff] %vm1754, %v2029
        %2046 = vst.msk [vmem:[%s442 + $0x28] sm:$0xff] %vm1754, %v2030
        %2047 = vst.msk [vmem:[%s442 + $0x38] sm:$0xff] %vm1754, %v2031
        %2048 = vst.msk [vmem:[%s442 + $0x48] sm:$0xff] %vm1754, %v2032
        %2049 = vst.msk [vmem:[%s442 + $0x58] sm:$0xff] %vm1754, %v2033
        %2050 = vst.msk [vmem:[%s442 + $0x68] sm:$0xff] %vm1754, %v2034
        %2051 = vst.msk [vmem:[%s442 + $0x78] sm:$0xff] %vm1754, %v2035
        %2052 = vst.msk [vmem:[%s442 + $0x88] sm:$0xff] %vm1754, %v2036
        %2053 = vst.msk [vmem:[%s442 + $0x98] sm:$0xff] %vm1754, %v2037
        %2054 = vst.msk [vmem:[%s442 + $0xa8] sm:$0xff] %vm1754, %v2038
        %2055 = vst.msk [vmem:[%s442 + $0xb8] sm:$0xff] %vm1754, %v2039
        %2056 = vst.msk [vmem:[%s442 + $0xc8] sm:$0xff] %vm1754, %v2040
        %2057 = vst.msk [vmem:[%s442 + $0xd8] sm:$0xff] %vm1754, %v2041
        %2058 = vst.msk [vmem:[%s442 + $0xe8] sm:$0xff] %vm1754, %v2042
        %2059 = vst.msk [vmem:[%s442 + $0xf8] sm:$0xff] %vm1754, %v2043
        %v2060 = vadd.f32 %v1932, %v1981
        %v2061 = vadd.f32 %v1933, %v1983
        %v2062 = vadd.f32 %v1934, %v1985
        %v2063 = vadd.f32 %v1935, %v1987
        %v2064 = vadd.f32 %v1936, %v1989
        %v2065 = vadd.f32 %v1937, %v1991
        %v2066 = vadd.f32 %v1938, %v1993
        %v2067 = vadd.f32 %v1939, %v1995
        %v2068 = vadd.f32 %v1940, %v1997
        %v2069 = vadd.f32 %v1941, %v1999
        %v2070 = vadd.f32 %v1942, %v2001
        %v2071 = vadd.f32 %v1943, %v2003
        %v2072 = vadd.f32 %v1944, %v2005
        %v2073 = vadd.f32 %v1945, %v2007
        %v2074 = vadd.f32 %v1946, %v2009
        %v2075 = vadd.f32 %v1947, %v2011
        %2076 = vst.msk [vmem:[%s442 + $0x8] sm:$0xff] %vm1787, %v2060
        %2077 = vst.msk [vmem:[%s442 + $0x18] sm:$0xff] %vm1787, %v2061
        %2078 = vst.msk [vmem:[%s442 + $0x28] sm:$0xff] %vm1787, %v2062
        %2079 = vst.msk [vmem:[%s442 + $0x38] sm:$0xff] %vm1787, %v2063
        %2080 = vst.msk [vmem:[%s442 + $0x48] sm:$0xff] %vm1787, %v2064
        %2081 = vst.msk [vmem:[%s442 + $0x58] sm:$0xff] %vm1787, %v2065
        %2082 = vst.msk [vmem:[%s442 + $0x68] sm:$0xff] %vm1787, %v2066
        %2083 = vst.msk [vmem:[%s442 + $0x78] sm:$0xff] %vm1787, %v2067
        %2084 = vst.msk [vmem:[%s442 + $0x88] sm:$0xff] %vm1787, %v2068
        %2085 = vst.msk [vmem:[%s442 + $0x98] sm:$0xff] %vm1787, %v2069
        %2086 = vst.msk [vmem:[%s442 + $0xa8] sm:$0xff] %vm1787, %v2070
        %2087 = vst.msk [vmem:[%s442 + $0xb8] sm:$0xff] %vm1787, %v2071
        %2088 = vst.msk [vmem:[%s442 + $0xc8] sm:$0xff] %vm1787, %v2072
        %2089 = vst.msk [vmem:[%s442 + $0xd8] sm:$0xff] %vm1787, %v2073
        %2090 = vst.msk [vmem:[%s442 + $0xe8] sm:$0xff] %vm1787, %v2074
        %2091 = vst.msk [vmem:[%s442 + $0xf8] sm:$0xff] %vm1787, %v2075
        %v2092 = vmul.f32 %v1261, %v1546
        %v2093 = vmul.f32 %v1267, %v1547
        %v2094 = vmul.f32 %v1273, %v1548
        %v2095 = vmul.f32 %v1279, %v1549
        %v2096 = vmul.f32 %v1285, %v1550
        %v2097 = vmul.f32 %v1291, %v1551
        %v2098 = vmul.f32 %v1297, %v1552
        %v2099 = vmul.f32 %v1303, %v1553
        %v2100 = vmul.f32 %v1309, %v1554
        %v2101 = vmul.f32 %v1315, %v1555
        %v2102 = vmul.f32 %v1321, %v1556
        %v2103 = vmul.f32 %v1327, %v1557
        %v2104 = vmul.f32 %v1333, %v1558
        %v2105 = vmul.f32 %v1339, %v1559
        %v2106 = vmul.f32 %v1345, %v1560
        %v2107 = vmul.f32 %v1351, %v1561
        %v2108 = vmul.f32 %v1261, %v1611
        %v2109 = vmul.f32 %v1267, %v1613
        %v2110 = vmul.f32 %v1273, %v1615
        %v2111 = vmul.f32 %v1279, %v1617
        %v2112 = vmul.f32 %v1285, %v1619
        %v2113 = vmul.f32 %v1291, %v1621
        %v2114 = vmul.f32 %v1297, %v1623
        %v2115 = vmul.f32 %v1303, %v1625
        %v2116 = vmul.f32 %v1309, %v1627
        %v2117 = vmul.f32 %v1315, %v1629
        %v2118 = vmul.f32 %v1321, %v1631
        %v2119 = vmul.f32 %v1327, %v1633
        %v2120 = vmul.f32 %v1333, %v1635
        %v2121 = vmul.f32 %v1339, %v1637
        %v2122 = vmul.f32 %v1345, %v1639
        %v2123 = vmul.f32 %v1351, %v1641
        %2140 = vrot.lane.b32.xlu0 %v2108, 64
        %v2141 = vpop.permute.xlu0 %2140
        %2142 = vrot.lane.b32.xlu0 %v2109, 64
        %v2143 = vpop.permute.xlu0 %2142
        %2144 = vrot.lane.b32.xlu0 %v2110, 64
        %v2145 = vpop.permute.xlu0 %2144
        %2146 = vrot.lane.b32.xlu0 %v2111, 64
        %v2147 = vpop.permute.xlu0 %2146
        %2148 = vrot.lane.b32.xlu0 %v2112, 64
        %v2149 = vpop.permute.xlu0 %2148
        %2150 = vrot.lane.b32.xlu0 %v2113, 64
        %v2151 = vpop.permute.xlu0 %2150
        %2152 = vrot.lane.b32.xlu0 %v2114, 64
        %v2153 = vpop.permute.xlu0 %2152
        %2154 = vrot.lane.b32.xlu0 %v2115, 64
        %v2155 = vpop.permute.xlu0 %2154
        %2156 = vrot.lane.b32.xlu0 %v2116, 64
        %v2157 = vpop.permute.xlu0 %2156
        %2158 = vrot.lane.b32.xlu0 %v2117, 64
        %v2159 = vpop.permute.xlu0 %2158
        %2160 = vrot.lane.b32.xlu0 %v2118, 64
        %v2161 = vpop.permute.xlu0 %2160
        %2162 = vrot.lane.b32.xlu0 %v2119, 64
        %v2163 = vpop.permute.xlu0 %2162
        %2164 = vrot.lane.b32.xlu0 %v2120, 64
        %v2165 = vpop.permute.xlu0 %2164
        %2166 = vrot.lane.b32.xlu0 %v2121, 64
        %v2167 = vpop.permute.xlu0 %2166
        %2168 = vrot.lane.b32.xlu0 %v2122, 64
        %v2169 = vpop.permute.xlu0 %2168
        %2170 = vrot.lane.b32.xlu0 %v2123, 64
        %v2171 = vpop.permute.xlu0 %2170
        %v2188 = vsub.f32 %v2092, %v2141
        %v2189 = vsub.f32 %v2093, %v2143
        %v2190 = vsub.f32 %v2094, %v2145
        %v2191 = vsub.f32 %v2095, %v2147
        %v2192 = vsub.f32 %v2096, %v2149
        %v2193 = vsub.f32 %v2097, %v2151
        %v2194 = vsub.f32 %v2098, %v2153
        %v2195 = vsub.f32 %v2099, %v2155
        %v2196 = vsub.f32 %v2100, %v2157
        %v2197 = vsub.f32 %v2101, %v2159
        %v2198 = vsub.f32 %v2102, %v2161
        %v2199 = vsub.f32 %v2103, %v2163
        %v2200 = vsub.f32 %v2104, %v2165
        %v2201 = vsub.f32 %v2105, %v2167
        %v2202 = vsub.f32 %v2106, %v2169
        %v2203 = vsub.f32 %v2107, %v2171
        %v2204 = vadd.f32 %v2092, %v2141
        %v2205 = vadd.f32 %v2093, %v2143
        %v2206 = vadd.f32 %v2094, %v2145
        %v2207 = vadd.f32 %v2095, %v2147
        %v2208 = vadd.f32 %v2096, %v2149
        %v2209 = vadd.f32 %v2097, %v2151
        %v2210 = vadd.f32 %v2098, %v2153
        %v2211 = vadd.f32 %v2099, %v2155
        %v2212 = vadd.f32 %v2100, %v2157
        %v2213 = vadd.f32 %v2101, %v2159
        %v2214 = vadd.f32 %v2102, %v2161
        %v2215 = vadd.f32 %v2103, %v2163
        %v2216 = vadd.f32 %v2104, %v2165
        %v2217 = vadd.f32 %v2105, %v2167
        %v2218 = vadd.f32 %v2106, %v2169
        %v2219 = vadd.f32 %v2107, %v2171
        %v2220 = vsel %vm1754, %v1900, %v1916
        %v2221 = vsel %vm1754, %v1901, %v1917
        %v2222 = vsel %vm1754, %v1902, %v1918
        %v2223 = vsel %vm1754, %v1903, %v1919
        %v2224 = vsel %vm1754, %v1904, %v1920
        %v2225 = vsel %vm1754, %v1905, %v1921
        %v2226 = vsel %vm1754, %v1906, %v1922
        %v2227 = vsel %vm1754, %v1907, %v1923
        %v2228 = vsel %vm1754, %v1908, %v1924
        %v2229 = vsel %vm1754, %v1909, %v1925
        %v2230 = vsel %vm1754, %v1910, %v1926
        %v2231 = vsel %vm1754, %v1911, %v1927
        %v2232 = vsel %vm1754, %v1912, %v1928
        %v2233 = vsel %vm1754, %v1913, %v1929
        %v2234 = vsel %vm1754, %v1914, %v1930
        %v2235 = vsel %vm1754, %v1915, %v1931
        %v2236 = vsel %vm1754, %v2188, %v2204
        %v2237 = vsel %vm1754, %v2189, %v2205
        %v2238 = vsel %vm1754, %v2190, %v2206
        %v2239 = vsel %vm1754, %v2191, %v2207
        %v2240 = vsel %vm1754, %v2192, %v2208
        %v2241 = vsel %vm1754, %v2193, %v2209
        %v2242 = vsel %vm1754, %v2194, %v2210
        %v2243 = vsel %vm1754, %v2195, %v2211
        %v2244 = vsel %vm1754, %v2196, %v2212
        %v2245 = vsel %vm1754, %v2197, %v2213
        %v2246 = vsel %vm1754, %v2198, %v2214
        %v2247 = vsel %vm1754, %v2199, %v2215
        %v2248 = vsel %vm1754, %v2200, %v2216
        %v2249 = vsel %vm1754, %v2201, %v2217
        %v2250 = vsel %vm1754, %v2202, %v2218
        %v2251 = vsel %vm1754, %v2203, %v2219
        %2252 = vxpose.xlu0.b32.start [1/16] %v2220, 128
        %2253 = vxpose.xlu0.b32.cont [2/16] %v2221, 128
        %2254 = vxpose.xlu0.b32.cont [3/16] %v2222, 128
        %2255 = vxpose.xlu0.b32.cont [4/16] %v2223, 128
        %2256 = vxpose.xlu0.b32.cont [5/16] %v2224, 128
        %2257 = vxpose.xlu0.b32.cont [6/16] %v2225, 128
        %2258 = vxpose.xlu0.b32.cont [7/16] %v2226, 128
        %2259 = vxpose.xlu0.b32.cont [8/16] %v2227, 128
        %2260 = vxpose.xlu0.b32.cont [9/16] %v2228, 128
        %2261 = vxpose.xlu0.b32.cont [10/16] %v2229, 128
        %2262 = vxpose.xlu0.b32.cont [11/16] %v2230, 128
        %2263 = vxpose.xlu0.b32.cont [12/16] %v2231, 128
        %2264 = vxpose.xlu0.b32.cont [13/16] %v2232, 128
        %2265 = vxpose.xlu0.b32.cont [14/16] %v2233, 128
        %2266 = vxpose.xlu0.b32.cont [15/16] %v2234, 128
        %2267 = vxpose.xlu0.b32.end [16/16] %v2235, 128
        %v2268 = vpop.trf.xlu0
        %v2269 = vpop.trf.xlu0
        %v2270 = vpop.trf.xlu0
        %v2271 = vpop.trf.xlu0
        %v2272 = vpop.trf.xlu0
        %v2273 = vpop.trf.xlu0
        %v2274 = vpop.trf.xlu0
        %v2275 = vpop.trf.xlu0
        %v2276 = vpop.trf.xlu0
        %v2277 = vpop.trf.xlu0
        %v2278 = vpop.trf.xlu0
        %v2279 = vpop.trf.xlu0
        %v2280 = vpop.trf.xlu0
        %v2281 = vpop.trf.xlu0
        %v2282 = vpop.trf.xlu0
        %v2283 = vpop.trf.xlu0
        %2284 = vxpose.xlu0.b32.start [1/16] %v2236, 128
        %2285 = vxpose.xlu0.b32.cont [2/16] %v2237, 128
        %2286 = vxpose.xlu0.b32.cont [3/16] %v2238, 128
        %2287 = vxpose.xlu0.b32.cont [4/16] %v2239, 128
        %2288 = vxpose.xlu0.b32.cont [5/16] %v2240, 128
        %2289 = vxpose.xlu0.b32.cont [6/16] %v2241, 128
        %2290 = vxpose.xlu0.b32.cont [7/16] %v2242, 128
        %2291 = vxpose.xlu0.b32.cont [8/16] %v2243, 128
        %2292 = vxpose.xlu0.b32.cont [9/16] %v2244, 128
        %2293 = vxpose.xlu0.b32.cont [10/16] %v2245, 128
        %2294 = vxpose.xlu0.b32.cont [11/16] %v2246, 128
        %2295 = vxpose.xlu0.b32.cont [12/16] %v2247, 128
        %2296 = vxpose.xlu0.b32.cont [13/16] %v2248, 128
        %2297 = vxpose.xlu0.b32.cont [14/16] %v2249, 128
        %2298 = vxpose.xlu0.b32.cont [15/16] %v2250, 128
        %2299 = vxpose.xlu0.b32.end [16/16] %v2251, 128
        %v2300 = vpop.trf.xlu0
        %v2301 = vpop.trf.xlu0
        %v2302 = vpop.trf.xlu0
        %v2303 = vpop.trf.xlu0
        %v2304 = vpop.trf.xlu0
        %v2305 = vpop.trf.xlu0
        %v2306 = vpop.trf.xlu0
        %v2307 = vpop.trf.xlu0
        %v2308 = vpop.trf.xlu0
        %v2309 = vpop.trf.xlu0
        %v2310 = vpop.trf.xlu0
        %v2311 = vpop.trf.xlu0
        %v2312 = vpop.trf.xlu0
        %v2313 = vpop.trf.xlu0
        %v2314 = vpop.trf.xlu0
        %v2315 = vpop.trf.xlu0
        %2316 = vst [vmem:[%s449] sm:$0xff] %v2268
        %2317 = vst [vmem:[%s449 + $0x8] sm:$0xff] %v2269
        %2318 = vst [vmem:[%s449 + $0x10] sm:$0xff] %v2270
        %2319 = vst [vmem:[%s449 + $0x18] sm:$0xff] %v2271
        %2320 = vst [vmem:[%s449 + $0x20] sm:$0xff] %v2272
        %2321 = vst [vmem:[%s449 + $0x28] sm:$0xff] %v2273
        %2322 = vst [vmem:[%s449 + $0x30] sm:$0xff] %v2274
        %2323 = vst [vmem:[%s449 + $0x38] sm:$0xff] %v2275
        %2324 = vst [vmem:[%s449 + $0x40] sm:$0xff] %v2276
        %2325 = vst [vmem:[%s449 + $0x48] sm:$0xff] %v2277
        %2326 = vst [vmem:[%s449 + $0x50] sm:$0xff] %v2278
        %2327 = vst [vmem:[%s449 + $0x58] sm:$0xff] %v2279
        %2328 = vst [vmem:[%s449 + $0x60] sm:$0xff] %v2280
        %2329 = vst [vmem:[%s449 + $0x68] sm:$0xff] %v2281
        %2330 = vst [vmem:[%s449 + $0x70] sm:$0xff] %v2282
        %2331 = vst [vmem:[%s449 + $0x78] sm:$0xff] %v2283
        %2332 = vst [vmem:[%s449 + $0x80] sm:$0xff] %v2300
        %2333 = vst [vmem:[%s449 + $0x88] sm:$0xff] %v2301
        %2334 = vst [vmem:[%s449 + $0x90] sm:$0xff] %v2302
        %2335 = vst [vmem:[%s449 + $0x98] sm:$0xff] %v2303
        %2336 = vst [vmem:[%s449 + $0xa0] sm:$0xff] %v2304
        %2337 = vst [vmem:[%s449 + $0xa8] sm:$0xff] %v2305
        %2338 = vst [vmem:[%s449 + $0xb0] sm:$0xff] %v2306
        %2339 = vst [vmem:[%s449 + $0xb8] sm:$0xff] %v2307
        %2340 = vst [vmem:[%s449 + $0xc0] sm:$0xff] %v2308
        %2341 = vst [vmem:[%s449 + $0xc8] sm:$0xff] %v2309
        %2342 = vst [vmem:[%s449 + $0xd0] sm:$0xff] %v2310
        %2343 = vst [vmem:[%s449 + $0xd8] sm:$0xff] %v2311
        %2344 = vst [vmem:[%s449 + $0xe0] sm:$0xff] %v2312
        %2345 = vst [vmem:[%s449 + $0xe8] sm:$0xff] %v2313
        %2346 = vst [vmem:[%s449 + $0xf0] sm:$0xff] %v2314
        %2347 = vst [vmem:[%s449 + $0xf8] sm:$0xff] %v2315
        %2348 = vst [vmem:[%s456] sm:$0xff] %v1420
        %2349 = vst [vmem:[%s456 + $0x8] sm:$0xff] %v1422
        %2350 = vst [vmem:[%s456 + $0x10] sm:$0xff] %v1426
        %2351 = vst [vmem:[%s456 + $0x18] sm:$0xff] %v1428
        %2352 = vst [vmem:[%s456 + $0x20] sm:$0xff] %v1432
        %2353 = vst [vmem:[%s456 + $0x28] sm:$0xff] %v1434
        %2354 = vst [vmem:[%s456 + $0x30] sm:$0xff] %v1438
        %2355 = vst [vmem:[%s456 + $0x38] sm:$0xff] %v1440
        %2356 = vst [vmem:[%s456 + $0x40] sm:$0xff] %v1444
        %2357 = vst [vmem:[%s456 + $0x48] sm:$0xff] %v1446
        %2358 = vst [vmem:[%s456 + $0x50] sm:$0xff] %v1450
        %2359 = vst [vmem:[%s456 + $0x58] sm:$0xff] %v1452
        %2360 = vst [vmem:[%s456 + $0x60] sm:$0xff] %v1456
        %2361 = vst [vmem:[%s456 + $0x68] sm:$0xff] %v1458
        %2362 = vst [vmem:[%s456 + $0x70] sm:$0xff] %v1462
        %2363 = vst [vmem:[%s456 + $0x78] sm:$0xff] %v1464
        %2364 = vst [vmem:[%s456 + $0x80] sm:$0xff] %v1468
        %2365 = vst [vmem:[%s456 + $0x88] sm:$0xff] %v1470
        %2366 = vst [vmem:[%s456 + $0x90] sm:$0xff] %v1474
        %2367 = vst [vmem:[%s456 + $0x98] sm:$0xff] %v1476
        %2368 = vst [vmem:[%s456 + $0xa0] sm:$0xff] %v1480
        %2369 = vst [vmem:[%s456 + $0xa8] sm:$0xff] %v1482
        %2370 = vst [vmem:[%s456 + $0xb0] sm:$0xff] %v1486
        %2371 = vst [vmem:[%s456 + $0xb8] sm:$0xff] %v1488
        %2372 = vst [vmem:[%s456 + $0xc0] sm:$0xff] %v1492
        %2373 = vst [vmem:[%s456 + $0xc8] sm:$0xff] %v1494
        %2374 = vst [vmem:[%s456 + $0xd0] sm:$0xff] %v1498
        %2375 = vst [vmem:[%s456 + $0xd8] sm:$0xff] %v1500
        %2376 = vst [vmem:[%s456 + $0xe0] sm:$0xff] %v1504
        %2377 = vst [vmem:[%s456 + $0xe8] sm:$0xff] %v1506
        %2378 = vst [vmem:[%s456 + $0xf0] sm:$0xff] %v1510
        %2379 = vst [vmem:[%s456 + $0xf8] sm:$0xff] %v1512
        %s2380 = sand.u32 %s198, 1
        %s2381 = scalar_lea.sflag [#allocation4], %s2380
        %s2382 = sand.u32 %s198, 1
        %s2383 = smul.addr %s2382, 256
        %s2384 = scalar_lea.vmem [#allocation10], %s2383
        %s2385 = sand.u32 %s33, 1
        %s2386 = scalar_lea.sflag [#allocation12], %s2385
        %s2387 = sand.u32 %s226, 1
        %s2388 = smul.addr %s2387, 256
        %s2389 = scalar_lea.vmem [#allocation11], %s2388
        %s2390 = sand.u32 %s33, 1
        %s2391 = scalar_lea.sflag [#allocation12], %s2390
        %s2392 = sand.u32 %s254, 1
        %s2393 = smul.addr %s2392, 256
        %s2394 = scalar_lea.vmem [#allocation13], %s2393
        // Predicated region
        $region61: #{tpu_custom_call.1} parent=43 // pred_check
          %p2395 = pneg %p208
        $region62: #{tpu_custom_call.1} parent=43 // pred_check_branch
          %2397 = sbr.rel (%p2395) target = $region64
        $region63: #{tpu_custom_call.1} parent=43 // pred_region
          %s2398 = smul.u32 16, %s38
          %s2400 = ssub.s32 4096, 4096
          %2401 = vsyncadd %s2381, %s2400
          %s2402 = smul.addr %s2398, 2
          %s2403 = smul.addr %s37, 64
          %s2404 = sadd.s32 %s2402, %s2403
          %s2405 = smul.addr %s2404, 128
          %s2406 = scalar_lea.hbm %s6, %s2405
          %s2407 = sshll.u32 %s2384, 4
          %s2408 = int_to_ptr.vmem [resolvable:$true] %s2407
          %2413 = dma.vmem_to_hbm [thread:$0]  %s2408, 4096, %s2406, %s2381, 256, 256, 16
        $region64: #{tpu_custom_call.1} parent=43 // pred_fallthru
          _
        // Predicated region
        $region65: #{tpu_custom_call.1} parent=43 // pred_check
          %p2414 = pneg %p236
        $region66: #{tpu_custom_call.1} parent=43 // pred_check_branch
          %2416 = sbr.rel (%p2414) target = $region68
        $region67: #{tpu_custom_call.1} parent=43 // pred_region
          %s2418 = ssub.s32 4096, 4096
          %2419 = vsyncadd %s2386, %s2418
          %s2420 = smul.addr %s37, 64
          %s2421 = sadd.s32 %s38, %s2420
          %s2422 = smul.addr %s2421, 128
          %s2423 = scalar_lea.hbm %s7, %s2422
          %s2424 = sshll.u32 %s2389, 4
          %s2425 = int_to_ptr.vmem [resolvable:$true] %s2424
          %2430 = dma.vmem_to_hbm [thread:$0]  %s2425, 4096, %s2423, %s2386, 128, 256, 8
        $region68: #{tpu_custom_call.1} parent=43 // pred_fallthru
          _
        // Predicated region
        $region69: #{tpu_custom_call.1} parent=43 // pred_check
          %p2431 = pneg %p264
        $region70: #{tpu_custom_call.1} parent=43 // pred_check_branch
          %2433 = sbr.rel (%p2431) target = $region72
        $region71: #{tpu_custom_call.1} parent=43 // pred_region
          %s2434 = smul.u32 16, %s38
          %s2436 = ssub.s32 4096, 4096
          %2437 = vsyncadd %s2391, %s2436
          %s2438 = smul.addr %s2434, 2
          %s2439 = smul.addr %s37, 64
          %s2440 = sadd.s32 %s2438, %s2439
          %s2441 = smul.addr %s2440, 128
          %s2442 = scalar_lea.hbm %s8, %s2441
          %s2443 = sshll.u32 %s2394, 4
          %s2444 = int_to_ptr.vmem [resolvable:$true] %s2443
          %2449 = dma.vmem_to_hbm [thread:$0]  %s2444, 4096, %s2442, %s2391, 256, 256, 16
        $region72: #{tpu_custom_call.1} parent=43 // pred_fallthru
          _
      $region44: #{tpu_custom_call.1} parent=5 // pred_fallthru
        _
      %p2450 = scmp.le.s32.totalorder 2, %s28
      // Predicated region
      $region73: #{tpu_custom_call.1} parent=5 // pred_check
        %p2451 = pneg %p2450
      $region74: #{tpu_custom_call.1} parent=5 // pred_check_branch
        %2453 = sbr.rel (%p2451) target = $region76
      $region75: #{tpu_custom_call.1} parent=5 // pred_region
        %s2454 = ssub.s32 %s28, 2
        // Predicated region
        $region77: #{tpu_custom_call.1} parent=75 // pred_check
          %p2455 = pneg %p214
        $region78: #{tpu_custom_call.1} parent=75 // pred_check_branch
          %2457 = sbr.rel (%p2455) target = $region80
        $region79: #{tpu_custom_call.1} parent=75 // pred_region
          %s2458 = sand.u32 %s199, 1
          %s2459 = scalar_lea.sflag [#allocation4], %s2458
          %s2460 = sand.u32 %s199, 1
          %s2461 = smul.addr %s2460, 256
          %s2462 = scalar_lea.vmem [#allocation10], %s2461
          %2463 = dma.done %s2459, 4096
        $region80: #{tpu_custom_call.1} parent=75 // pred_fallthru
          _
        // Predicated region
        $region81: #{tpu_custom_call.1} parent=75 // pred_check
          %p2464 = pneg %p242
        $region82: #{tpu_custom_call.1} parent=75 // pred_check_branch
          %2466 = sbr.rel (%p2464) target = $region84
        $region83: #{tpu_custom_call.1} parent=75 // pred_region
          %s2467 = sand.u32 %s34, 1
          %s2468 = scalar_lea.sflag [#allocation12], %s2467
          %s2469 = sand.u32 %s227, 1
          %s2470 = smul.addr %s2469, 256
          %s2471 = scalar_lea.vmem [#allocation11], %s2470
          %2472 = dma.done %s2468, 4096
        $region84: #{tpu_custom_call.1} parent=75 // pred_fallthru
          _
        // Predicated region
        $region85: #{tpu_custom_call.1} parent=75 // pred_check
          %p2473 = pneg %p270
        $region86: #{tpu_custom_call.1} parent=75 // pred_check_branch
          %2475 = sbr.rel (%p2473) target = $region88
        $region87: #{tpu_custom_call.1} parent=75 // pred_region
          %s2476 = sand.u32 %s34, 1
          %s2477 = scalar_lea.sflag [#allocation12], %s2476
          %s2478 = sand.u32 %s255, 1
          %s2479 = smul.addr %s2478, 256
          %s2480 = scalar_lea.vmem [#allocation13], %s2479
          %2481 = dma.done %s2477, 4096
        $region88: #{tpu_custom_call.1} parent=75 // pred_fallthru
          _
      $region76: #{tpu_custom_call.1} parent=5 // pred_fallthru
        _
    $region6: #{tpu_custom_call.1} parent=1 // loop_footer
      %s32 = sadd.s32 1, %s28
    $region7: #{tpu_custom_call.1} parent=1 // loop_footer_branch
      %27 = sbr.rel target = $region3
    $region8: #{tpu_custom_call.1} parent=1 // loop_exit
      _
    %2482 = vsyncpa [#allocation3], 1
    %s2483 = scalar_lea.sflag [#allocation3], 1
    %2484 = vsyncpa %s2483, 1
    %2485 = vsyncpa [#allocation6], 1
    %s2486 = scalar_lea.sflag [#allocation6], 1
    %2487 = vsyncpa %s2486, 1
    %2488 = vsyncpa [#allocation9], 1
    %2489 = vsyncpa [#allocation4], 1
    %s2490 = scalar_lea.sflag [#allocation4], 1
    %2491 = vsyncpa %s2490, 1
    %2492 = vsyncpa [#allocation12], 1
    %s2493 = scalar_lea.sflag [#allocation12], 1
    %2494 = vsyncpa %s2493, 1

</llo_original>
